<compile_context>
chip_gen: v5e
topology: v5e:2x2
jax: 0.10.0
libtpu: 0.0.40
codegen_flags: <defaults>
</compile_context>

<pallas_src>
import math

import jax
import jax.numpy as jnp
from jax import lax
from jax.experimental import pallas as pl
from jax.experimental.pallas import tpu as pltpu


# ----------------------------- Pallas kernel ------------------------------ #
def block_kernel(x_ref, mask_ref, wqkv_ref, w1_ref, w2_ref,
                 vecd_ref, vec4_ref, o_ref):
    """One grid step = `batches_per_step` batch elements as one row slab.

    x_ref / o_ref : (R, D) f32, R = batches_per_step * T * n_heads,
                    rows ordered (batch, t, head) exactly like (B, T, N, D).
    mask_ref      : (R, R) f32 additive bias, 0 where attention is allowed
                    (same batch, same head, causal), -1e30 elsewhere.
    wqkv_ref      : (D, 3D)  fused [Wq/sqrt(D) | Wk | Wv @ Wp]   (f32 or bf16)
    w1_ref        : (D, 4D)  MLP up-projection
    w2_ref        : (4D, D)  MLP down-projection
    vecd_ref      : (6, D)   rows = [b_proj, ln1_g, ln1_b, b_mlp2, ln2_g, ln2_b]
    vec4_ref      : (2, 4D)  row0 = [bq/sqrt(D) | bk | bv@Wp | zero pad],
                             row1 = b_mlp1
    """
    x = x_ref[...]                               # (R, D) f32
    R, D = x.shape
    cdt = wqkv_ref.dtype                         # MXU operand dtype

    vecd = vecd_ref[...]
    b_p, g1, be1, b2, g2, be2 = (vecd[i:i + 1, :] for i in range(6))
    vec4 = vec4_ref[...]
    b_qkv = vec4[0:1, :3 * D]                    # (1, 3D)
    b1 = vec4[1:2, :]                            # (1, 4D)

    def mm(a, w):
        # cast operands to the MXU dtype (no-op for f32); always accumulate f32
        return jnp.dot(a.astype(cdt), w.astype(cdt),
                       preferred_element_type=jnp.float32)

    # ---- fused QKV projection (1/sqrt(D) folded into Wq/bq, Wp into Wv/bv) ----
    qkv = mm(x, wqkv_ref[...]) + b_qkv           # (R, 3D) f32
    q = qkv[:, :D]
    k = qkv[:, D:2 * D]
    v = qkv[:, 2 * D:]                           # already output-projected

    # ---- fused multi-head masked causal attention ----
    # One (R, R) score matrix over all (batch, t, head) rows; entries outside
    # "same batch AND same head AND causal" are killed by the precomputed
    # additive mask, which is numerically identical to per-head softmax.
    s = lax.dot_general(q.astype(cdt), k.astype(cdt),
                        (((1,), (1,)), ((), ())),
                        preferred_element_type=jnp.float32)    # (R, R)
    s = s + mask_ref[...]                        # 0 / -1e30 additive bias
    s = s - jnp.max(s, axis=-1, keepdims=True)   # diagonal always kept
    p = jnp.exp(s)
    p = p * pl.reciprocal(jnp.sum(p, axis=-1, keepdims=True), approx=True)

    attn = mm(p, v) + b_p                        # projection folded into v
    h = x + attn                                 # residual 1

    def layer_norm(y, g, b, eps=1e-5):
        mu = jnp.mean(y, axis=-1, keepdims=True)
        var = jnp.mean((y - mu) ** 2, axis=-1, keepdims=True)
        return (y - mu) * lax.rsqrt(var + eps) * g + b

    h1 = layer_norm(h, g1, be1)                  # ln1

    # ---- MLP: Linear(D,4D) -> exact-erf GELU -> Linear(4D,D) ----
    m1 = mm(h1, w1_ref[...]) + b1                # (R, 4D)
    m1 = 0.5 * m1 * (1.0 + lax.erf(m1 * (1.0 / math.sqrt(2.0))))
    m2 = mm(m1, w2_ref[...]) + b2                # (R, D)

    h2 = h1 + m2                                 # residual 2
    o_ref[...] = layer_norm(h2, g2, be2)         # ln2


# --------------------------- parameter packing ------------------------------ #
def prepare_params(p, mxu_dtype=jnp.bfloat16):
    """Fuse/pack the 16 raw tensors into 5 kernel inputs (Wp folded away)."""
    D = p["wq"].shape[0]
    inv = jnp.float32(1.0 / math.sqrt(D))

    # Fold the attention output projection into the V branch (exact:
    # (P @ V) @ Wp == P @ (V @ Wp)); bp stays as the post-attention bias.
    wv_p = p["wv"] @ p["wp"]                                            # (D, D)
    bv_p = p["bv"] @ p["wp"]                                            # (1, D)

    w_qkv = jnp.concatenate([p["wq"] * inv, p["wk"], wv_p], axis=1)     # (D, 3D)
    b_qkv = jnp.concatenate([p["bq"] * inv, p["bk"], bv_p], axis=1)     # (1, 3D)

    vec_d = jnp.concatenate(
        [p["bp"], p["g1"], p["be1"], p["b2"], p["g2"], p["be2"]], axis=0)  # (6, D)

    pad = jnp.zeros((1, D), jnp.float32)                 # 4D - 3D = D
    vec_4d = jnp.concatenate(
        [jnp.concatenate([b_qkv, pad], axis=1), p["b1"]], axis=0)          # (2, 4D)

    return (w_qkv.astype(mxu_dtype), p["w1"].astype(mxu_dtype),
            p["w2"].astype(mxu_dtype),
            vec_d.astype(jnp.float32), vec_4d.astype(jnp.float32))


def build_mask_bias(batches_per_step, T, n_heads):
    """Additive attention bias for one grid step's (R, R) score matrix."""
    M = T * n_heads
    R = batches_per_step * M
    idx = jnp.arange(R)
    b = idx // M                        # step-local batch index
    t = (idx % M) // n_heads            # time step
    h = idx % n_heads                   # head
    keep = ((b[:, None] == b[None, :])
            & (h[:, None] == h[None, :])
            & (t[:, None] >= t[None, :]))
    return jnp.where(keep, 0.0, -1e30).astype(jnp.float32)


# ------------------------------- wrapper ----------------------------------- #
def block_forward(x, params, mxu_dtype=jnp.bfloat16, batches_per_step=None):
    """x: (B, T, N, D) float32. Returns same shape.

    batches_per_step=None folds the whole batch into a single grid step
    (best on v5e/v6e); on v7x set batches_per_step=B//2 to give both
    TensorCores a "parallel" step if that beats the per-step overhead.
    """
    B, T, N, D = x.shape
    M = T * N
    if batches_per_step is None:
        batches_per_step = B
    assert B % batches_per_step == 0
    n_steps = B // batches_per_step
    Rb = batches_per_step * M
    R = B * M

    x2 = x.reshape(R, D)                         # free reshape, no transpose

    mask_bias = build_mask_bias(batches_per_step, T, N)
    w_qkv, w1, w2, vec_d, vec_4d = prepare_params(params, mxu_dtype)
    resident = (mask_bias, w_qkv, w1, w2, vec_d, vec_4d)

    # Advisory cost for XLA scheduling of this tiny custom call.
    flops = int(2 * R * D * 3 * D            # fused QKV (Wp folded in)
                + 2 * R * Rb * D * 2         # QK^T + PV on the fused slab
                + 2 * R * D * 4 * D * 2)     # MLP up + down
    transcendentals = int(R * Rb + R * 4 * D)            # exp + erf
    bytes_accessed = int(sum(int(a.size) * a.dtype.itemsize for a in resident)
                         + 2 * R * D * 4)

    slab_spec = pl.BlockSpec((Rb, D), lambda i: (i, 0))

    def build(pipeline_hint):
        def resident_spec(shape):
            nd = len(shape)
            imap = lambda i, _nd=nd: (0,) * _nd
            if pipeline_hint is None:
                return pl.BlockSpec(shape, imap)
            return pl.BlockSpec(shape, imap, pipeline_mode=pipeline_hint)

        return pl.pallas_call(
            block_kernel,
            out_shape=jax.ShapeDtypeStruct((R, D), jnp.float32),
            grid_spec=pltpu.PrefetchScalarGridSpec(
                num_scalar_prefetch=0,
                grid=(n_steps,),
                in_specs=[slab_spec] + [resident_spec(a.shape) for a in resident],
                out_specs=slab_spec,
            ),
            compiler_params=pltpu.CompilerParams(
                dimension_semantics=("parallel",)),
            cost_estimate=pl.CostEstimate(
                flops=flops, transcendentals=transcendentals,
                bytes_accessed=bytes_accessed),
        )

    try:
        # Weight/mask block indices never change across the grid: request
        # single buffering so no redundant second VMEM copy is kept.
        out = build(pl.Buffered(1))(x2, *resident)
    except Exception:
        # pipeline_mode is a pure perf hint; fall back if this JAX build
        # rejects it on the top-level pallas_call.
        out = build(None)(x2, *resident)

    return out.reshape(B, T, N, D)


# --------------------------- pure-JAX reference ----------------------------- #
def block_ref(x, p):
    B, T, N, D = x.shape
    xt = jnp.transpose(x, (0, 2, 1, 3))              # (B, N, T, D)

    def lin(y, w, b):
        return jnp.einsum("bntd,de->bnte", y, w) + b.reshape(1, 1, 1, -1)

    q = lin(xt, p["wq"], p["bq"])
    k = lin(xt, p["wk"], p["bk"])
    v = lin(xt, p["wv"], p["bv"])
    s = jnp.einsum("bnqd,bnkd->bnqk", q, k) / math.sqrt(D)
    mask = jnp.tril(jnp.ones((T, T), bool))
    s = jnp.where(mask, s, -jnp.inf)
    pr = jax.nn.softmax(s, axis=-1)
    a = jnp.einsum("bnqk,bnkd->bnqd", pr, v)
    a = lin(a, p["wp"], p["bp"])
    h = xt + a

    def ln(y, g, be):
        mu = y.mean(-1, keepdims=True)
        var = ((y - mu) ** 2).mean(-1, keepdims=True)
        return ((y - mu) / jnp.sqrt(var + 1e-5) * g.reshape(1, 1, 1, -1)
                + be.reshape(1, 1, 1, -1))

    h1 = ln(h, p["g1"], p["be1"])
    m = lin(h1, p["w1"], p["b1"])
    m = 0.5 * m * (1.0 + jax.scipy.special.erf(m / math.sqrt(2.0)))
    m = lin(m, p["w2"], p["b2"])
    h2 = h1 + m
    out = ln(h2, p["g2"], p["be2"])
    return jnp.transpose(out, (0, 2, 1, 3))


# ------------------------------ parameter init ------------------------------ #
def init_params(key, h_dim):
    D = h_dim
    ks = jax.random.split(key, 12)
    scale = 0.05

    def w(k, shape):
        return (scale * jax.random.normal(k, shape)).astype(jnp.float32)

    return {
        # linear weights stored as (in, out) so kernel does x @ W; biases (1, out)
        "wq": w(ks[0], (D, D)), "bq": w(ks[1], (1, D)),
        "wk": w(ks[2], (D, D)), "bk": w(ks[3], (1, D)),
        "wv": w(ks[4], (D, D)), "bv": w(ks[5], (1, D)),
        "wp": w(ks[6], (D, D)), "bp": w(ks[7], (1, D)),
        "g1": jnp.ones((1, D), jnp.float32), "be1": jnp.zeros((1, D), jnp.float32),
        "w1": w(ks[8], (D, 4 * D)), "b1": w(ks[9], (1, 4 * D)),
        "w2": w(ks[10], (4 * D, D)), "b2": w(ks[11], (1, D)),
        "g2": jnp.ones((1, D), jnp.float32), "be2": jnp.zeros((1, D), jnp.float32),
    }


# ---------------------------------- main ------------------------------------ #
if __name__ == "__main__":
    B, T, n_heads, h_dim = 2, 8, 2, 32   # x: (B, T, n_heads, h_dim)

    key = jax.random.PRNGKey(0)
    kx, kp = jax.random.split(key)
    x = jax.random.normal(kx, (B, T, n_heads, h_dim), dtype=jnp.float32)
    params = init_params(kp, h_dim)

    ref = jax.block_until_ready(block_ref(x, params))

    # exact-parity path: f32 MXU operands, whole batch fused into one grid step
    out_f32 = jax.block_until_ready(
        block_forward(x, params, mxu_dtype=jnp.float32))
    assert out_f32.shape == x.shape
    err_f32 = float(jnp.max(jnp.abs(out_f32 - ref)))
    assert err_f32 < 5e-3, err_f32

    # default perf path: bf16 MXU operands (valid on v5e/v6e/v7x), f32 elementwise
    out_bf16 = jax.block_until_ready(block_forward(x, params))
    assert out_bf16.shape == x.shape
    err_bf16 = float(jnp.max(jnp.abs(out_bf16 - ref)))
    assert err_bf16 < 7e-2, err_bf16

    # multi-step grid variant (e.g. v7x: one "parallel" step per TensorCore)
    out_2step = jax.block_until_ready(
        block_forward(x, params, batches_per_step=1))
    err_2step = float(jnp.max(jnp.abs(out_2step - ref)))
    assert err_2step < 7e-2, err_2step

    print("KERNEL_OK")
</pallas_src>

<mosaic_0001>
module attributes {stable_mosaic.version = 11 : i64} {
  func.func @block_kernel(%arg0: i32, %arg1: memref<32x32xf32, #tpu.memory_space<vmem>>, %arg2: memref<32x32xf32, #tpu.memory_space<vmem>>, %arg3: memref<32x96xf32, #tpu.memory_space<vmem>>, %arg4: memref<32x128xf32, #tpu.memory_space<vmem>>, %arg5: memref<128x32xf32, #tpu.memory_space<vmem>>, %arg6: memref<6x32xf32, #tpu.memory_space<vmem>>, %arg7: memref<2x128xf32, #tpu.memory_space<vmem>>, %arg8: memref<32x32xf32, #tpu.memory_space<vmem>>) attributes {dimension_semantics = [#tpu.dimension_semantics<parallel>], iteration_bounds = array<i64: 1>, scalar_prefetch = 0 : i64, scratch_operands = 0 : i64, tpu.core_type = #tpu.core_type<tc>, window_params = [{transform_indices = @transform_0, window_bounds = array<i64: 32, 32>}, {pipeline_mode = #tpu.pipeline_mode<synchronous>, transform_indices = @transform_1, window_bounds = array<i64: 32, 32>}, {pipeline_mode = #tpu.pipeline_mode<synchronous>, transform_indices = @transform_2, window_bounds = array<i64: 32, 96>}, {pipeline_mode = #tpu.pipeline_mode<synchronous>, transform_indices = @transform_3, window_bounds = array<i64: 32, 128>}, {pipeline_mode = #tpu.pipeline_mode<synchronous>, transform_indices = @transform_4, window_bounds = array<i64: 128, 32>}, {pipeline_mode = #tpu.pipeline_mode<synchronous>, transform_indices = @transform_5, window_bounds = array<i64: 6, 32>}, {pipeline_mode = #tpu.pipeline_mode<synchronous>, transform_indices = @transform_6, window_bounds = array<i64: 2, 128>}, {transform_indices = @transform_7, window_bounds = array<i64: 32, 32>}]} {
    %c0 = arith.constant 0 : index
    %c0_0 = arith.constant 0 : index
    %0 = vector.load %arg1[%c0, %c0_0] : memref<32x32xf32, #tpu.memory_space<vmem>>, vector<32x32xf32>
    %c0_1 = arith.constant 0 : index
    %c0_2 = arith.constant 0 : index
    %1 = vector.load %arg6[%c0_1, %c0_2] : memref<6x32xf32, #tpu.memory_space<vmem>>, vector<6x32xf32>
    %2 = vector.extract_strided_slice %1 {offsets = [0, 0], sizes = [1, 32], strides = [1, 1]} : vector<6x32xf32> to vector<1x32xf32>
    %3 = vector.extract_strided_slice %1 {offsets = [1, 0], sizes = [1, 32], strides = [1, 1]} : vector<6x32xf32> to vector<1x32xf32>
    %4 = vector.extract_strided_slice %1 {offsets = [2, 0], sizes = [1, 32], strides = [1, 1]} : vector<6x32xf32> to vector<1x32xf32>
    %5 = vector.extract_strided_slice %1 {offsets = [3, 0], sizes = [1, 32], strides = [1, 1]} : vector<6x32xf32> to vector<1x32xf32>
    %6 = vector.extract_strided_slice %1 {offsets = [4, 0], sizes = [1, 32], strides = [1, 1]} : vector<6x32xf32> to vector<1x32xf32>
    %7 = vector.extract_strided_slice %1 {offsets = [5, 0], sizes = [1, 32], strides = [1, 1]} : vector<6x32xf32> to vector<1x32xf32>
    %c0_3 = arith.constant 0 : index
    %c0_4 = arith.constant 0 : index
    %8 = vector.load %arg7[%c0_3, %c0_4] : memref<2x128xf32, #tpu.memory_space<vmem>>, vector<2x128xf32>
    %9 = vector.extract_strided_slice %8 {offsets = [0, 0], sizes = [1, 96], strides = [1, 1]} : vector<2x128xf32> to vector<1x96xf32>
    %10 = vector.extract_strided_slice %8 {offsets = [1, 0], sizes = [1, 128], strides = [1, 1]} : vector<2x128xf32> to vector<1x128xf32>
    %c0_5 = arith.constant 0 : index
    %c0_6 = arith.constant 0 : index
    %11 = vector.load %arg3[%c0_5, %c0_6] : memref<32x96xf32, #tpu.memory_space<vmem>>, vector<32x96xf32>
    %cst = arith.constant dense<0.000000e+00> : vector<32x96xf32>
    %12 = tpu.matmul %0, %11, %cst {dimension_numbers = #tpu.dot_dimension_numbers<[1], [0], [0], [1], [0, 0, 1, 1], [], []>} : vector<32x32xf32>, vector<32x96xf32>, vector<32x96xf32> -> vector<32x96xf32>
    %13 = vector.broadcast %9 : vector<1x96xf32> to vector<32x96xf32>
    %14 = arith.addf %12, %13 : vector<32x96xf32>
    %15 = vector.extract_strided_slice %14 {offsets = [0, 0], sizes = [32, 32], strides = [1, 1]} : vector<32x96xf32> to vector<32x32xf32>
    %16 = vector.extract_strided_slice %14 {offsets = [0, 32], sizes = [32, 32], strides = [1, 1]} : vector<32x96xf32> to vector<32x32xf32>
    %17 = vector.extract_strided_slice %14 {offsets = [0, 64], sizes = [32, 32], strides = [1, 1]} : vector<32x96xf32> to vector<32x32xf32>
    %cst_7 = arith.constant dense<0.000000e+00> : vector<32x32xf32>
    %18 = tpu.matmul %15, %16, %cst_7 {dimension_numbers = #tpu.dot_dimension_numbers<[1], [1], [0], [0], [0, 0, 1, 0], [], []>} : vector<32x32xf32>, vector<32x32xf32>, vector<32x32xf32> -> vector<32x32xf32>
    %c0_8 = arith.constant 0 : index
    %c0_9 = arith.constant 0 : index
    %19 = vector.load %arg2[%c0_8, %c0_9] : memref<32x32xf32, #tpu.memory_space<vmem>>, vector<32x32xf32>
    %20 = arith.addf %18, %19 : vector<32x32xf32>
    %cst_10 = arith.constant dense<0xFF800000> : vector<32xf32>
    %21 = vector.multi_reduction <maximumf>, %20, %cst_10 [1] : vector<32x32xf32> to vector<32xf32>
    %22 = vector.shape_cast %21 : vector<32xf32> to vector<32x1xf32>
    %23 = vector.broadcast %22 : vector<32x1xf32> to vector<32x32xf32>
    %24 = arith.subf %20, %23 : vector<32x32xf32>
    %25 = math.exp %24 : vector<32x32xf32>
    %cst_11 = arith.constant dense<0.000000e+00> : vector<32xf32>
    %26 = vector.multi_reduction <add>, %25, %cst_11 [1] : vector<32x32xf32> to vector<32xf32>
    %27 = vector.shape_cast %26 : vector<32xf32> to vector<32x1xf32>
    %28 = tpu.reciprocal %27 {approx = true} : vector<32x1xf32> -> vector<32x1xf32>
    %29 = vector.broadcast %28 : vector<32x1xf32> to vector<32x32xf32>
    %30 = arith.mulf %25, %29 : vector<32x32xf32>
    %cst_12 = arith.constant dense<0.000000e+00> : vector<32x32xf32>
    %31 = tpu.matmul %30, %17, %cst_12 {dimension_numbers = #tpu.dot_dimension_numbers<[1], [0], [0], [1], [0, 0, 1, 1], [], []>} : vector<32x32xf32>, vector<32x32xf32>, vector<32x32xf32> -> vector<32x32xf32>
    %32 = vector.broadcast %2 : vector<1x32xf32> to vector<32x32xf32>
    %33 = arith.addf %31, %32 : vector<32x32xf32>
    %34 = arith.addf %0, %33 : vector<32x32xf32>
    %cst_13 = arith.constant dense<0.000000e+00> : vector<32xf32>
    %35 = vector.multi_reduction <add>, %34, %cst_13 [1] : vector<32x32xf32> to vector<32xf32>
    %36 = vector.shape_cast %35 : vector<32xf32> to vector<32x1xf32>
    %cst_14 = arith.constant 3.200000e+01 : f32
    %37 = vector.broadcast %cst_14 : f32 to vector<32x1xf32>
    %38 = arith.divf %36, %37 : vector<32x1xf32>
    %39 = vector.broadcast %38 : vector<32x1xf32> to vector<32x32xf32>
    %40 = arith.subf %34, %39 : vector<32x32xf32>
    %41 = arith.mulf %40, %40 : vector<32x32xf32>
    %cst_15 = arith.constant dense<0.000000e+00> : vector<32xf32>
    %42 = vector.multi_reduction <add>, %41, %cst_15 [1] : vector<32x32xf32> to vector<32xf32>
    %43 = vector.shape_cast %42 : vector<32xf32> to vector<32x1xf32>
    %cst_16 = arith.constant 3.200000e+01 : f32
    %44 = vector.broadcast %cst_16 : f32 to vector<32x1xf32>
    %45 = arith.divf %43, %44 : vector<32x1xf32>
    %46 = vector.broadcast %38 : vector<32x1xf32> to vector<32x32xf32>
    %47 = arith.subf %34, %46 : vector<32x32xf32>
    %cst_17 = arith.constant 9.99999974E-6 : f32
    %48 = vector.broadcast %cst_17 : f32 to vector<32x1xf32>
    %49 = arith.addf %45, %48 : vector<32x1xf32>
    %50 = math.rsqrt %49 : vector<32x1xf32>
    %51 = vector.broadcast %50 : vector<32x1xf32> to vector<32x32xf32>
    %52 = arith.mulf %47, %51 : vector<32x32xf32>
    %53 = vector.broadcast %3 : vector<1x32xf32> to vector<32x32xf32>
    %54 = arith.mulf %52, %53 : vector<32x32xf32>
    %55 = vector.broadcast %4 : vector<1x32xf32> to vector<32x32xf32>
    %56 = arith.addf %54, %55 : vector<32x32xf32>
    %c0_18 = arith.constant 0 : index
    %c0_19 = arith.constant 0 : index
    %57 = vector.load %arg4[%c0_18, %c0_19] : memref<32x128xf32, #tpu.memory_space<vmem>>, vector<32x128xf32>
    %cst_20 = arith.constant dense<0.000000e+00> : vector<32x128xf32>
    %58 = tpu.matmul %56, %57, %cst_20 {dimension_numbers = #tpu.dot_dimension_numbers<[1], [0], [0], [1], [0, 0, 1, 1], [], []>} : vector<32x32xf32>, vector<32x128xf32>, vector<32x128xf32> -> vector<32x128xf32>
    %59 = vector.broadcast %10 : vector<1x128xf32> to vector<32x128xf32>
    %60 = arith.addf %58, %59 : vector<32x128xf32>
    %cst_21 = arith.constant 5.000000e-01 : f32
    %61 = vector.broadcast %cst_21 : f32 to vector<32x128xf32>
    %62 = arith.mulf %61, %60 : vector<32x128xf32>
    %cst_22 = arith.constant 0.707106769 : f32
    %63 = vector.broadcast %cst_22 : f32 to vector<32x128xf32>
    %64 = arith.mulf %60, %63 : vector<32x128xf32>
    %65 = math.erf %64 : vector<32x128xf32>
    %cst_23 = arith.constant 1.000000e+00 : f32
    %66 = vector.broadcast %cst_23 : f32 to vector<32x128xf32>
    %67 = arith.addf %66, %65 : vector<32x128xf32>
    %68 = arith.mulf %62, %67 : vector<32x128xf32>
    %c0_24 = arith.constant 0 : index
    %c0_25 = arith.constant 0 : index
    %69 = vector.load %arg5[%c0_24, %c0_25] : memref<128x32xf32, #tpu.memory_space<vmem>>, vector<128x32xf32>
    %cst_26 = arith.constant dense<0.000000e+00> : vector<32x32xf32>
    %70 = tpu.matmul %68, %69, %cst_26 {dimension_numbers = #tpu.dot_dimension_numbers<[1], [0], [0], [1], [0, 0, 1, 1], [], []>} : vector<32x128xf32>, vector<128x32xf32>, vector<32x32xf32> -> vector<32x32xf32>
    %71 = vector.broadcast %5 : vector<1x32xf32> to vector<32x32xf32>
    %72 = arith.addf %70, %71 : vector<32x32xf32>
    %73 = arith.addf %56, %72 : vector<32x32xf32>
    %cst_27 = arith.constant dense<0.000000e+00> : vector<32xf32>
    %74 = vector.multi_reduction <add>, %73, %cst_27 [1] : vector<32x32xf32> to vector<32xf32>
    %75 = vector.shape_cast %74 : vector<32xf32> to vector<32x1xf32>
    %cst_28 = arith.constant 3.200000e+01 : f32
    %76 = vector.broadcast %cst_28 : f32 to vector<32x1xf32>
    %77 = arith.divf %75, %76 : vector<32x1xf32>
    %78 = vector.broadcast %77 : vector<32x1xf32> to vector<32x32xf32>
    %79 = arith.subf %73, %78 : vector<32x32xf32>
    %80 = arith.mulf %79, %79 : vector<32x32xf32>
    %cst_29 = arith.constant dense<0.000000e+00> : vector<32xf32>
    %81 = vector.multi_reduction <add>, %80, %cst_29 [1] : vector<32x32xf32> to vector<32xf32>
    %82 = vector.shape_cast %81 : vector<32xf32> to vector<32x1xf32>
    %cst_30 = arith.constant 3.200000e+01 : f32
    %83 = vector.broadcast %cst_30 : f32 to vector<32x1xf32>
    %84 = arith.divf %82, %83 : vector<32x1xf32>
    %85 = vector.broadcast %77 : vector<32x1xf32> to vector<32x32xf32>
    %86 = arith.subf %73, %85 : vector<32x32xf32>
    %cst_31 = arith.constant 9.99999974E-6 : f32
    %87 = vector.broadcast %cst_31 : f32 to vector<32x1xf32>
    %88 = arith.addf %84, %87 : vector<32x1xf32>
    %89 = math.rsqrt %88 : vector<32x1xf32>
    %90 = vector.broadcast %89 : vector<32x1xf32> to vector<32x32xf32>
    %91 = arith.mulf %86, %90 : vector<32x32xf32>
    %92 = vector.broadcast %6 : vector<1x32xf32> to vector<32x32xf32>
    %93 = arith.mulf %91, %92 : vector<32x32xf32>
    %94 = vector.broadcast %7 : vector<1x32xf32> to vector<32x32xf32>
    %95 = arith.addf %93, %94 : vector<32x32xf32>
    %c0_32 = arith.constant 0 : index
    %c0_33 = arith.constant 0 : index
    %96 = vector.load %arg8[%c0_32, %c0_33] : memref<32x32xf32, #tpu.memory_space<vmem>>, vector<32x32xf32>
    tpu.vector_store %arg8[%c0_32, %c0_33], %95 {strides = array<i32>} : memref<32x32xf32, #tpu.memory_space<vmem>>, vector<32x32xf32>,
    return
  }
  func.func @transform_0(%arg0: i32) -> (i32, i32) {
    %c0_i32 = arith.constant 0 : i32
    %c0_i32_0 = arith.constant 0 : i32
    return %arg0, %c0_i32 : i32, i32
  }
  func.func @transform_1(%arg0: i32) -> (i32, i32) {
    %c0_i32 = arith.constant 0 : i32
    %c0_i32_0 = arith.constant 0 : i32
    %c0_i32_1 = arith.constant 0 : i32
    return %c0_i32, %c0_i32_0 : i32, i32
  }
  func.func @transform_2(%arg0: i32) -> (i32, i32) {
    %c0_i32 = arith.constant 0 : i32
    %c0_i32_0 = arith.constant 0 : i32
    %c0_i32_1 = arith.constant 0 : i32
    return %c0_i32, %c0_i32_0 : i32, i32
  }
  func.func @transform_3(%arg0: i32) -> (i32, i32) {
    %c0_i32 = arith.constant 0 : i32
    %c0_i32_0 = arith.constant 0 : i32
    %c0_i32_1 = arith.constant 0 : i32
    return %c0_i32, %c0_i32_0 : i32, i32
  }
  func.func @transform_4(%arg0: i32) -> (i32, i32) {
    %c0_i32 = arith.constant 0 : i32
    %c0_i32_0 = arith.constant 0 : i32
    %c0_i32_1 = arith.constant 0 : i32
    return %c0_i32, %c0_i32_0 : i32, i32
  }
  func.func @transform_5(%arg0: i32) -> (i32, i32) {
    %c0_i32 = arith.constant 0 : i32
    %c0_i32_0 = arith.constant 0 : i32
    %c0_i32_1 = arith.constant 0 : i32
    return %c0_i32, %c0_i32_0 : i32, i32
  }
  func.func @transform_6(%arg0: i32) -> (i32, i32) {
    %c0_i32 = arith.constant 0 : i32
    %c0_i32_0 = arith.constant 0 : i32
    %c0_i32_1 = arith.constant 0 : i32
    return %c0_i32, %c0_i32_0 : i32, i32
  }
  func.func @transform_7(%arg0: i32) -> (i32, i32) {
    %c0_i32 = arith.constant 0 : i32
    %c0_i32_0 = arith.constant 0 : i32
    return %arg0, %c0_i32 : i32, i32
  }
}

module attributes {stable_mosaic.version = 11 : i64} {
  func.func @block_kernel(%arg0: i32, %arg1: memref<32x32xf32, #tpu.memory_space<vmem>>, %arg2: memref<32x32xf32, #tpu.memory_space<vmem>>, %arg3: memref<32x96xf32, #tpu.memory_space<vmem>>, %arg4: memref<32x128xf32, #tpu.memory_space<vmem>>, %arg5: memref<128x32xf32, #tpu.memory_space<vmem>>, %arg6: memref<6x32xf32, #tpu.memory_space<vmem>>, %arg7: memref<2x128xf32, #tpu.memory_space<vmem>>, %arg8: memref<32x32xf32, #tpu.memory_space<vmem>>) attributes {dimension_semantics = [#tpu.dimension_semantics<parallel>], iteration_bounds = array<i64: 1>, scalar_prefetch = 0 : i64, scratch_operands = 0 : i64, tpu.core_type = #tpu.core_type<tc>, window_params = [{transform_indices = @transform_0, window_bounds = array<i64: 32, 32>}, {pipeline_mode = #tpu.pipeline_mode<synchronous>, transform_indices = @transform_1, window_bounds = array<i64: 32, 32>}, {pipeline_mode = #tpu.pipeline_mode<synchronous>, transform_indices = @transform_2, window_bounds = array<i64: 32, 96>}, {pipeline_mode = #tpu.pipeline_mode<synchronous>, transform_indices = @transform_3, window_bounds = array<i64: 32, 128>}, {pipeline_mode = #tpu.pipeline_mode<synchronous>, transform_indices = @transform_4, window_bounds = array<i64: 128, 32>}, {pipeline_mode = #tpu.pipeline_mode<synchronous>, transform_indices = @transform_5, window_bounds = array<i64: 6, 32>}, {pipeline_mode = #tpu.pipeline_mode<synchronous>, transform_indices = @transform_6, window_bounds = array<i64: 2, 128>}, {transform_indices = @transform_7, window_bounds = array<i64: 32, 32>}]} {
    %c0 = arith.constant 0 : index
    %c0_0 = arith.constant 0 : index
    %0 = vector.load %arg1[%c0, %c0_0] : memref<32x32xf32, #tpu.memory_space<vmem>>, vector<32x32xf32>
    %c0_1 = arith.constant 0 : index
    %c0_2 = arith.constant 0 : index
    %1 = vector.load %arg6[%c0_1, %c0_2] : memref<6x32xf32, #tpu.memory_space<vmem>>, vector<6x32xf32>
    %2 = vector.extract_strided_slice %1 {offsets = [0, 0], sizes = [1, 32], strides = [1, 1]} : vector<6x32xf32> to vector<1x32xf32>
    %3 = vector.extract_strided_slice %1 {offsets = [1, 0], sizes = [1, 32], strides = [1, 1]} : vector<6x32xf32> to vector<1x32xf32>
    %4 = vector.extract_strided_slice %1 {offsets = [2, 0], sizes = [1, 32], strides = [1, 1]} : vector<6x32xf32> to vector<1x32xf32>
    %5 = vector.extract_strided_slice %1 {offsets = [3, 0], sizes = [1, 32], strides = [1, 1]} : vector<6x32xf32> to vector<1x32xf32>
    %6 = vector.extract_strided_slice %1 {offsets = [4, 0], sizes = [1, 32], strides = [1, 1]} : vector<6x32xf32> to vector<1x32xf32>
    %7 = vector.extract_strided_slice %1 {offsets = [5, 0], sizes = [1, 32], strides = [1, 1]} : vector<6x32xf32> to vector<1x32xf32>
    %c0_3 = arith.constant 0 : index
    %c0_4 = arith.constant 0 : index
    %8 = vector.load %arg7[%c0_3, %c0_4] : memref<2x128xf32, #tpu.memory_space<vmem>>, vector<2x128xf32>
    %9 = vector.extract_strided_slice %8 {offsets = [0, 0], sizes = [1, 96], strides = [1, 1]} : vector<2x128xf32> to vector<1x96xf32>
    %10 = vector.extract_strided_slice %8 {offsets = [1, 0], sizes = [1, 128], strides = [1, 1]} : vector<2x128xf32> to vector<1x128xf32>
    %c0_5 = arith.constant 0 : index
    %c0_6 = arith.constant 0 : index
    %11 = vector.load %arg3[%c0_5, %c0_6] : memref<32x96xf32, #tpu.memory_space<vmem>>, vector<32x96xf32>
    %cst = arith.constant dense<0.000000e+00> : vector<32x96xf32>
    %12 = tpu.matmul %0, %11, %cst {dimension_numbers = #tpu.dot_dimension_numbers<[1], [0], [0], [1], [0, 0, 1, 1], [], []>} : vector<32x32xf32>, vector<32x96xf32>, vector<32x96xf32> -> vector<32x96xf32>
    %13 = vector.broadcast %9 : vector<1x96xf32> to vector<32x96xf32>
    %14 = arith.addf %12, %13 : vector<32x96xf32>
    %15 = vector.extract_strided_slice %14 {offsets = [0, 0], sizes = [32, 32], strides = [1, 1]} : vector<32x96xf32> to vector<32x32xf32>
    %16 = vector.extract_strided_slice %14 {offsets = [0, 32], sizes = [32, 32], strides = [1, 1]} : vector<32x96xf32> to vector<32x32xf32>
    %17 = vector.extract_strided_slice %14 {offsets = [0, 64], sizes = [32, 32], strides = [1, 1]} : vector<32x96xf32> to vector<32x32xf32>
    %cst_7 = arith.constant dense<0.000000e+00> : vector<32x32xf32>
    %18 = tpu.matmul %15, %16, %cst_7 {dimension_numbers = #tpu.dot_dimension_numbers<[1], [1], [0], [0], [0, 0, 1, 0], [], []>} : vector<32x32xf32>, vector<32x32xf32>, vector<32x32xf32> -> vector<32x32xf32>
    %c0_8 = arith.constant 0 : index
    %c0_9 = arith.constant 0 : index
    %19 = vector.load %arg2[%c0_8, %c0_9] : memref<32x32xf32, #tpu.memory_space<vmem>>, vector<32x32xf32>
    %20 = arith.addf %18, %19 : vector<32x32xf32>
    %cst_10 = arith.constant dense<0xFF800000> : vector<32xf32>
    %21 = vector.multi_reduction <maximumf>, %20, %cst_10 [1] : vector<32x32xf32> to vector<32xf32>
    %22 = vector.shape_cast %21 : vector<32xf32> to vector<32x1xf32>
    %23 = vector.broadcast %22 : vector<32x1xf32> to vector<32x32xf32>
    %24 = arith.subf %20, %23 : vector<32x32xf32>
    %25 = math.exp %24 : vector<32x32xf32>
    %cst_11 = arith.constant dense<0.000000e+00> : vector<32xf32>
    %26 = vector.multi_reduction <add>, %25, %cst_11 [1] : vector<32x32xf32> to vector<32xf32>
    %27 = vector.shape_cast %26 : vector<32xf32> to vector<32x1xf32>
    %28 = tpu.reciprocal %27 {approx = true} : vector<32x1xf32> -> vector<32x1xf32>
    %29 = vector.broadcast %28 : vector<32x1xf32> to vector<32x32xf32>
    %30 = arith.mulf %25, %29 : vector<32x32xf32>
    %cst_12 = arith.constant dense<0.000000e+00> : vector<32x32xf32>
    %31 = tpu.matmul %30, %17, %cst_12 {dimension_numbers = #tpu.dot_dimension_numbers<[1], [0], [0], [1], [0, 0, 1, 1], [], []>} : vector<32x32xf32>, vector<32x32xf32>, vector<32x32xf32> -> vector<32x32xf32>
    %32 = vector.broadcast %2 : vector<1x32xf32> to vector<32x32xf32>
    %33 = arith.addf %31, %32 : vector<32x32xf32>
    %34 = arith.addf %0, %33 : vector<32x32xf32>
    %cst_13 = arith.constant dense<0.000000e+00> : vector<32xf32>
    %35 = vector.multi_reduction <add>, %34, %cst_13 [1] : vector<32x32xf32> to vector<32xf32>
    %36 = vector.shape_cast %35 : vector<32xf32> to vector<32x1xf32>
    %cst_14 = arith.constant 3.200000e+01 : f32
    %37 = vector.broadcast %cst_14 : f32 to vector<32x1xf32>
    %38 = arith.divf %36, %37 : vector<32x1xf32>
    %39 = vector.broadcast %38 : vector<32x1xf32> to vector<32x32xf32>
    %40 = arith.subf %34, %39 : vector<32x32xf32>
    %41 = arith.mulf %40, %40 : vector<32x32xf32>
    %cst_15 = arith.constant dense<0.000000e+00> : vector<32xf32>
    %42 = vector.multi_reduction <add>, %41, %cst_15 [1] : vector<32x32xf32> to vector<32xf32>
    %43 = vector.shape_cast %42 : vector<32xf32> to vector<32x1xf32>
    %cst_16 = arith.constant 3.200000e+01 : f32
    %44 = vector.broadcast %cst_16 : f32 to vector<32x1xf32>
    %45 = arith.divf %43, %44 : vector<32x1xf32>
    %46 = vector.broadcast %38 : vector<32x1xf32> to vector<32x32xf32>
    %47 = arith.subf %34, %46 : vector<32x32xf32>
    %cst_17 = arith.constant 9.99999974E-6 : f32
    %48 = vector.broadcast %cst_17 : f32 to vector<32x1xf32>
    %49 = arith.addf %45, %48 : vector<32x1xf32>
    %50 = math.rsqrt %49 : vector<32x1xf32>
    %51 = vector.broadcast %50 : vector<32x1xf32> to vector<32x32xf32>
    %52 = arith.mulf %47, %51 : vector<32x32xf32>
    %53 = vector.broadcast %3 : vector<1x32xf32> to vector<32x32xf32>
    %54 = arith.mulf %52, %53 : vector<32x32xf32>
    %55 = vector.broadcast %4 : vector<1x32xf32> to vector<32x32xf32>
    %56 = arith.addf %54, %55 : vector<32x32xf32>
    %c0_18 = arith.constant 0 : index
    %c0_19 = arith.constant 0 : index
    %57 = vector.load %arg4[%c0_18, %c0_19] : memref<32x128xf32, #tpu.memory_space<vmem>>, vector<32x128xf32>
    %cst_20 = arith.constant dense<0.000000e+00> : vector<32x128xf32>
    %58 = tpu.matmul %56, %57, %cst_20 {dimension_numbers = #tpu.dot_dimension_numbers<[1], [0], [0], [1], [0, 0, 1, 1], [], []>} : vector<32x32xf32>, vector<32x128xf32>, vector<32x128xf32> -> vector<32x128xf32>
    %59 = vector.broadcast %10 : vector<1x128xf32> to vector<32x128xf32>
    %60 = arith.addf %58, %59 : vector<32x128xf32>
    %cst_21 = arith.constant 5.000000e-01 : f32
    %61 = vector.broadcast %cst_21 : f32 to vector<32x128xf32>
    %62 = arith.mulf %61, %60 : vector<32x128xf32>
    %cst_22 = arith.constant 0.707106769 : f32
    %63 = vector.broadcast %cst_22 : f32 to vector<32x128xf32>
    %64 = arith.mulf %60, %63 : vector<32x128xf32>
    %65 = math.erf %64 : vector<32x128xf32>
    %cst_23 = arith.constant 1.000000e+00 : f32
    %66 = vector.broadcast %cst_23 : f32 to vector<32x128xf32>
    %67 = arith.addf %66, %65 : vector<32x128xf32>
    %68 = arith.mulf %62, %67 : vector<32x128xf32>
    %c0_24 = arith.constant 0 : index
    %c0_25 = arith.constant 0 : index
    %69 = vector.load %arg5[%c0_24, %c0_25] : memref<128x32xf32, #tpu.memory_space<vmem>>, vector<128x32xf32>
    %cst_26 = arith.constant dense<0.000000e+00> : vector<32x32xf32>
    %70 = tpu.matmul %68, %69, %cst_26 {dimension_numbers = #tpu.dot_dimension_numbers<[1], [0], [0], [1], [0, 0, 1, 1], [], []>} : vector<32x128xf32>, vector<128x32xf32>, vector<32x32xf32> -> vector<32x32xf32>
    %71 = vector.broadcast %5 : vector<1x32xf32> to vector<32x32xf32>
    %72 = arith.addf %70, %71 : vector<32x32xf32>
    %73 = arith.addf %56, %72 : vector<32x32xf32>
    %cst_27 = arith.constant dense<0.000000e+00> : vector<32xf32>
    %74 = vector.multi_reduction <add>, %73, %cst_27 [1] : vector<32x32xf32> to vector<32xf32>
    %75 = vector.shape_cast %74 : vector<32xf32> to vector<32x1xf32>
    %cst_28 = arith.constant 3.200000e+01 : f32
    %76 = vector.broadcast %cst_28 : f32 to vector<32x1xf32>
    %77 = arith.divf %75, %76 : vector<32x1xf32>
    %78 = vector.broadcast %77 : vector<32x1xf32> to vector<32x32xf32>
    %79 = arith.subf %73, %78 : vector<32x32xf32>
    %80 = arith.mulf %79, %79 : vector<32x32xf32>
    %cst_29 = arith.constant dense<0.000000e+00> : vector<32xf32>
    %81 = vector.multi_reduction <add>, %80, %cst_29 [1] : vector<32x32xf32> to vector<32xf32>
    %82 = vector.shape_cast %81 : vector<32xf32> to vector<32x1xf32>
    %cst_30 = arith.constant 3.200000e+01 : f32
    %83 = vector.broadcast %cst_30 : f32 to vector<32x1xf32>
    %84 = arith.divf %82, %83 : vector<32x1xf32>
    %85 = vector.broadcast %77 : vector<32x1xf32> to vector<32x32xf32>
    %86 = arith.subf %73, %85 : vector<32x32xf32>
    %cst_31 = arith.constant 9.99999974E-6 : f32
    %87 = vector.broadcast %cst_31 : f32 to vector<32x1xf32>
    %88 = arith.addf %84, %87 : vector<32x1xf32>
    %89 = math.rsqrt %88 : vector<32x1xf32>
    %90 = vector.broadcast %89 : vector<32x1xf32> to vector<32x32xf32>
    %91 = arith.mulf %86, %90 : vector<32x32xf32>
    %92 = vector.broadcast %6 : vector<1x32xf32> to vector<32x32xf32>
    %93 = arith.mulf %91, %92 : vector<32x32xf32>
    %94 = vector.broadcast %7 : vector<1x32xf32> to vector<32x32xf32>
    %95 = arith.addf %93, %94 : vector<32x32xf32>
    %c0_32 = arith.constant 0 : index
    %c0_33 = arith.constant 0 : index
    %96 = vector.load %arg8[%c0_32, %c0_33] : memref<32x32xf32, #tpu.memory_space<vmem>>, vector<32x32xf32>
    tpu.vector_store %arg8[%c0_32, %c0_33], %95 {strides = array<i32>} : memref<32x32xf32, #tpu.memory_space<vmem>>, vector<32x32xf32>,
    return
  }
  func.func @transform_0(%arg0: i32) -> (i32, i32) {
    %c0_i32 = arith.constant 0 : i32
    %c0_i32_0 = arith.constant 0 : i32
    return %arg0, %c0_i32 : i32, i32
  }
  func.func @transform_1(%arg0: i32) -> (i32, i32) {
    %c0_i32 = arith.constant 0 : i32
    %c0_i32_0 = arith.constant 0 : i32
    %c0_i32_1 = arith.constant 0 : i32
    return %c0_i32, %c0_i32_0 : i32, i32
  }
  func.func @transform_2(%arg0: i32) -> (i32, i32) {
    %c0_i32 = arith.constant 0 : i32
    %c0_i32_0 = arith.constant 0 : i32
    %c0_i32_1 = arith.constant 0 : i32
    return %c0_i32, %c0_i32_0 : i32, i32
  }
  func.func @transform_3(%arg0: i32) -> (i32, i32) {
    %c0_i32 = arith.constant 0 : i32
    %c0_i32_0 = arith.constant 0 : i32
    %c0_i32_1 = arith.constant 0 : i32
    return %c0_i32, %c0_i32_0 : i32, i32
  }
  func.func @transform_4(%arg0: i32) -> (i32, i32) {
    %c0_i32 = arith.constant 0 : i32
    %c0_i32_0 = arith.constant 0 : i32
    %c0_i32_1 = arith.constant 0 : i32
    return %c0_i32, %c0_i32_0 : i32, i32
  }
  func.func @transform_5(%arg0: i32) -> (i32, i32) {
    %c0_i32 = arith.constant 0 : i32
    %c0_i32_0 = arith.constant 0 : i32
    %c0_i32_1 = arith.constant 0 : i32
    return %c0_i32, %c0_i32_0 : i32, i32
  }
  func.func @transform_6(%arg0: i32) -> (i32, i32) {
    %c0_i32 = arith.constant 0 : i32
    %c0_i32_0 = arith.constant 0 : i32
    %c0_i32_1 = arith.constant 0 : i32
    return %c0_i32, %c0_i32_0 : i32, i32
  }
  func.func @transform_7(%arg0: i32) -> (i32, i32) {
    %c0_i32 = arith.constant 0 : i32
    %c0_i32_0 = arith.constant 0 : i32
    return %arg0, %c0_i32 : i32, i32
  }
}

</mosaic_0001>

<llo_original>
// kernel: tpu_custom_call.1
$region0: #{tpu_custom_call.1}
  #allocation0 [shape = 'u32[]', space=smem, size = 0x4, offset = 0x4, fixed_abs, tag = 'smem constant byte address 0x4 - core index']
  #allocation1 [shape = 'u32[72,128]{1,0:T(1,128)}', space=vmem, size = 0x9000, scoped, tag = 'internal scratch']
  %s0 = inlined_call_operand.vmem [shape: f32[32,32], index: 0, kind: input, shape index: {}]
  %s1 = inlined_call_operand.vmem [shape: f32[32,32], index: 1, kind: input, shape index: {}]
  %s2 = inlined_call_operand.vmem [shape: f32[32,96], index: 2, kind: input, shape index: {}]
  %s3 = inlined_call_operand.vmem [shape: f32[32,128], index: 3, kind: input, shape index: {}]
  %s4 = inlined_call_operand.vmem [shape: f32[128,32], index: 4, kind: input, shape index: {}]
  %s5 = inlined_call_operand.vmem [shape: f32[6,32], index: 5, kind: input, shape index: {}]
  %s6 = inlined_call_operand.vmem [shape: f32[2,128], index: 6, kind: input, shape index: {}]
  %s7 = inlined_call_operand.hbm [shape: f32[32,32], index: 7, kind: output, shape index: {}]
  %s8 = sld [smem:[#allocation0]]
  $region38: #{tpu_custom_call.1} parent=0
    _
  %s10 = ssub.s32 1, %s8
  %s11 = scalar_select 0, %s10, %s8
  $region1: #{tpu_custom_call.1} parent=0
    #allocation2 [shape = 'u8[16384]{0}', space=vmem, size = 0x4000, scoped, tag = 'output window, operand 0, single buffered']
    #allocation3 [shape = 's32[1]{0}', space=sflag, size = 0x4, scoped, tag = 'scoped memory for tpu_custom_call.1']
    %12 = vsyncpa [#allocation3], 0
    // Predicated region
    $region2: #{tpu_custom_call.1} parent=1 // pred_check
      _
    $region3: #{tpu_custom_call.1} parent=1 // pred_check_branch
      %14 = sbr.rel (0) target = $region5
    $region4: #{tpu_custom_call.1} parent=1 // pred_region
      _
    $region5: #{tpu_custom_call.1} parent=1 // pred_fallthru
      _
    // Predicated region
    $region6: #{tpu_custom_call.1} parent=1 // pred_check
      _
    $region7: #{tpu_custom_call.1} parent=1 // pred_check_branch
      %16 = sbr.rel (0) target = $region9
    $region8: #{tpu_custom_call.1} parent=1 // pred_region
      _
    $region9: #{tpu_custom_call.1} parent=1 // pred_fallthru
      _
    // Predicated region
    $region10: #{tpu_custom_call.1} parent=1 // pred_check
      _
    $region11: #{tpu_custom_call.1} parent=1 // pred_check_branch
      %18 = sbr.rel (0) target = $region13
    $region12: #{tpu_custom_call.1} parent=1 // pred_region
      _
    $region13: #{tpu_custom_call.1} parent=1 // pred_fallthru
      _
    // Predicated region
    $region14: #{tpu_custom_call.1} parent=1 // pred_check
      _
    $region15: #{tpu_custom_call.1} parent=1 // pred_check_branch
      %20 = sbr.rel (0) target = $region17
    $region16: #{tpu_custom_call.1} parent=1 // pred_region
      _
    $region17: #{tpu_custom_call.1} parent=1 // pred_fallthru
      _
    // Predicated region
    $region18: #{tpu_custom_call.1} parent=1 // pred_check
      _
    $region19: #{tpu_custom_call.1} parent=1 // pred_check_branch
      %22 = sbr.rel (0) target = $region21
    $region20: #{tpu_custom_call.1} parent=1 // pred_region
      _
    $region21: #{tpu_custom_call.1} parent=1 // pred_fallthru
      _
    // Predicated region
    $region22: #{tpu_custom_call.1} parent=1 // pred_check
      _
    $region23: #{tpu_custom_call.1} parent=1 // pred_check_branch
      %24 = sbr.rel (0) target = $region25
    $region24: #{tpu_custom_call.1} parent=1 // pred_region
      _
    $region25: #{tpu_custom_call.1} parent=1 // pred_fallthru
      _
    // Predicated region
    $region26: #{tpu_custom_call.1} parent=1 // pred_check
      _
    $region27: #{tpu_custom_call.1} parent=1 // pred_check_branch
      %26 = sbr.rel (0) target = $region29
    $region28: #{tpu_custom_call.1} parent=1 // pred_region
      _
    $region29: #{tpu_custom_call.1} parent=1 // pred_fallthru
      _
    %v27 = vld [vmem:[%s0] sm:$0xff]
    %v28 = vld [vmem:[%s0 + $0x8] sm:$0xff]
    %v29 = vld [vmem:[%s0 + $0x10] sm:$0xff]
    %v30 = vld [vmem:[%s0 + $0x18] sm:$0xff]
    %v31 = vld [vmem:[%s5] sm:$0x3f]
    %v32 = vld [vmem:[%s6] sm:$0x3]
    %v33 = vld [vmem:[%s2] sm:$0xff]
    %v34 = vld [vmem:[%s2 + $0x8] sm:$0xff]
    %v35 = vld [vmem:[%s2 + $0x10] sm:$0xff]
    %v36 = vld [vmem:[%s2 + $0x18] sm:$0xff]
    %v37 = vperm.slane %v32, 0
    %vm38 = vcmask 261120
    %v40 = vsel %vm38, %v27, 0
    %v43 = vsel %vm38, %v28, 0
    %v46 = vsel %vm38, %v29, 0
    %v49 = vsel %vm38, %v30, 0
    %51 = vmatpush.msra.mxu0 0.0
    %52 = vmatpush.msra.mxu0 0.0
    %53 = vmatpush.msra.mxu0 0.0
    %54 = vmatpush.msra.mxu0 0.0
    %55 = vmatpush.msra.mxu0 0.0
    %56 = vmatpush.msra.mxu0 0.0
    %57 = vmatpush.msra.mxu0 0.0
    %58 = vmatpush.msra.mxu0 0.0
    %59 = vmatpush.msra.mxu0 0.0
    %60 = vmatpush.msra.mxu0 0.0
    %61 = vmatpush.msra.mxu0 0.0
    %62 = vmatpush.msra.mxu0 0.0
    %63 = vmatpush.msra.mxu0 %v36
    %64 = vmatpush.msra.mxu0 %v35
    %65 = vmatpush.msra.mxu0 %v34
    %66 = vmatpush.msra.mxu0 %v33
    %67 = vmatmul.f32.gmra.mxu0 %v40
    %v68 = vpop.f32.mrf.mxu0
    %v69 = vadd.f32 %v37, %v68
    %70 = vmatmul.f32.gmra.mxu0 %v43
    %v71 = vpop.f32.mrf.mxu0
    %v72 = vadd.f32 %v37, %v71
    %73 = vmatmul.f32.gmra.mxu0 %v46
    %v74 = vpop.f32.mrf.mxu0
    %v75 = vadd.f32 %v37, %v74
    %76 = vmatmul.f32.gmra.mxu0 %v49
    %v77 = vpop.f32.mrf.mxu0
    %v78 = vadd.f32 %v37, %v77
    %79 = vdwg.mxu0
    %v80 = vld [vmem:[%s1] sm:$0xff]
    %v81 = vld [vmem:[%s1 + $0x8] sm:$0xff]
    %v82 = vld [vmem:[%s1 + $0x10] sm:$0xff]
    %v83 = vld [vmem:[%s1 + $0x18] sm:$0xff]
    %88 = vrot.lane.b32.xlu0 %v69, 96
    %v89 = vpop.permute.xlu0 %88
    %90 = vrot.lane.b32.xlu0 %v72, 96
    %v91 = vpop.permute.xlu0 %90
    %92 = vrot.lane.b32.xlu0 %v75, 96
    %v93 = vpop.permute.xlu0 %92
    %94 = vrot.lane.b32.xlu0 %v78, 96
    %v95 = vpop.permute.xlu0 %94
    %v96 = vsel %vm38, %v69, 0
    %v98 = vsel %vm38, %v72, 0
    %v100 = vsel %vm38, %v75, 0
    %v102 = vsel %vm38, %v78, 0
    %v104 = vsel %vm38, %v89, 0
    %v106 = vsel %vm38, %v91, 0
    %v108 = vsel %vm38, %v93, 0
    %v110 = vsel %vm38, %v95, 0
    %112 = vmatpush.xpose.msra.mxu0 0.0
    %113 = vmatpush.xpose.msra.mxu0 0.0
    %114 = vmatpush.xpose.msra.mxu0 0.0
    %115 = vmatpush.xpose.msra.mxu0 0.0
    %116 = vmatpush.xpose.msra.mxu0 0.0
    %117 = vmatpush.xpose.msra.mxu0 0.0
    %118 = vmatpush.xpose.msra.mxu0 0.0
    %119 = vmatpush.xpose.msra.mxu0 0.0
    %120 = vmatpush.xpose.msra.mxu0 0.0
    %121 = vmatpush.xpose.msra.mxu0 0.0
    %122 = vmatpush.xpose.msra.mxu0 0.0
    %123 = vmatpush.xpose.msra.mxu0 0.0
    %124 = vmatpush.xpose.msra.mxu0 %v110
    %125 = vmatpush.xpose.msra.mxu0 %v108
    %126 = vmatpush.xpose.msra.mxu0 %v106
    %127 = vmatpush.xpose.msra.mxu0 %v104
    %128 = vmatmul.f32.gmra.mxu0 %v96
    %v129 = vpop.f32.mrf.mxu0
    %v130 = vadd.f32 %v80, %v129
    %131 = vmatmul.f32.gmra.mxu0 %v98
    %v132 = vpop.f32.mrf.mxu0
    %v133 = vadd.f32 %v81, %v132
    %134 = vmatmul.f32.gmra.mxu0 %v100
    %v135 = vpop.f32.mrf.mxu0
    %v136 = vadd.f32 %v82, %v135
    %137 = vmatmul.f32.gmra.mxu0 %v102
    %v138 = vpop.f32.mrf.mxu0
    %v139 = vadd.f32 %v83, %v138
    %140 = vdwg.mxu0
    %v141 = vsel %vm38, %v130, -inf
    %142 = vmax.xlane.f32.xlu0 %v141
    %v143 = vpop.xlane.xlu0 %142
    %v144 = vsel %vm38, %v133, -inf
    %145 = vmax.xlane.f32.xlu0 %v144
    %v146 = vpop.xlane.xlu0 %145
    %v147 = vsel %vm38, %v136, -inf
    %148 = vmax.xlane.f32.xlu0 %v147
    %v149 = vpop.xlane.xlu0 %148
    %v150 = vsel %vm38, %v139, -inf
    %151 = vmax.xlane.f32.xlu0 %v150
    %v152 = vpop.xlane.xlu0 %151
    %v153 = vsub.f32 %v130, %v143
    %v154 = vsub.f32 %v133, %v146
    %v155 = vsub.f32 %v136, %v149
    %v156 = vsub.f32 %v139, %v152
    %v157 = vmul.f32 %v153, 1.442695
    %v158 = vpow.pop %v157
    %v159 = vmul.f32 %v154, 1.442695
    %v160 = vpow.pop %v159
    %v161 = vmul.f32 %v155, 1.442695
    %v162 = vpow.pop %v161
    %v163 = vmul.f32 %v156, 1.442695
    %v164 = vpow.pop %v163
    %v165 = vsel %vm38, %v158, 0.0
    %166 = vadd.xlane.f32.xlu0 %v165
    %v167 = vpop.xlane.xlu0 %166
    %v168 = vsel %vm38, %v160, 0.0
    %169 = vadd.xlane.f32.xlu0 %v168
    %v170 = vpop.xlane.xlu0 %169
    %v171 = vsel %vm38, %v162, 0.0
    %172 = vadd.xlane.f32.xlu0 %v171
    %v173 = vpop.xlane.xlu0 %172
    %v174 = vsel %vm38, %v164, 0.0
    %175 = vadd.xlane.f32.xlu0 %v174
    %v176 = vpop.xlane.xlu0 %175
    %v177 = vrcp.pop %v167
    %v178 = vrcp.pop %v170
    %v179 = vrcp.pop %v173
    %v180 = vrcp.pop %v176
    %v181 = vmul.f32 %v158, %v177
    %v182 = vmul.f32 %v160, %v178
    %v183 = vmul.f32 %v162, %v179
    %v184 = vmul.f32 %v164, %v180
    %v185 = vperm.slane %v31, 0
    %186 = vrot.lane.b32.xlu0 %v69, 64
    %v187 = vpop.permute.xlu0 %186
    %188 = vrot.lane.b32.xlu0 %v72, 64
    %v189 = vpop.permute.xlu0 %188
    %190 = vrot.lane.b32.xlu0 %v75, 64
    %v191 = vpop.permute.xlu0 %190
    %192 = vrot.lane.b32.xlu0 %v78, 64
    %v193 = vpop.permute.xlu0 %192
    %v199 = vsel %vm38, %v181, 0
    %v202 = vsel %vm38, %v182, 0
    %v205 = vsel %vm38, %v183, 0
    %v208 = vsel %vm38, %v184, 0
    %210 = vmatpush.msra.mxu0 0.0
    %211 = vmatpush.msra.mxu0 0.0
    %212 = vmatpush.msra.mxu0 0.0
    %213 = vmatpush.msra.mxu0 0.0
    %214 = vmatpush.msra.mxu0 0.0
    %215 = vmatpush.msra.mxu0 0.0
    %216 = vmatpush.msra.mxu0 0.0
    %217 = vmatpush.msra.mxu0 0.0
    %218 = vmatpush.msra.mxu0 0.0
    %219 = vmatpush.msra.mxu0 0.0
    %220 = vmatpush.msra.mxu0 0.0
    %221 = vmatpush.msra.mxu0 0.0
    %222 = vmatpush.msra.mxu0 %v193
    %223 = vmatpush.msra.mxu0 %v191
    %224 = vmatpush.msra.mxu0 %v189
    %225 = vmatpush.msra.mxu0 %v187
    %226 = vmatmul.f32.gmra.mxu0 %v199
    %v227 = vpop.f32.mrf.mxu0
    %v228 = vadd.f32 %v185, %v227
    %229 = vmatmul.f32.gmra.mxu0 %v202
    %v230 = vpop.f32.mrf.mxu0
    %v231 = vadd.f32 %v185, %v230
    %232 = vmatmul.f32.gmra.mxu0 %v205
    %v233 = vpop.f32.mrf.mxu0
    %v234 = vadd.f32 %v185, %v233
    %235 = vmatmul.f32.gmra.mxu0 %v208
    %v236 = vpop.f32.mrf.mxu0
    %v237 = vadd.f32 %v185, %v236
    %238 = vdwg.mxu0
    %v239 = vadd.f32 %v27, %v228
    %v240 = vadd.f32 %v28, %v231
    %v241 = vadd.f32 %v29, %v234
    %v242 = vadd.f32 %v30, %v237
    %v243 = vsel %vm38, %v239, 0.0
    %244 = vadd.xlane.f32.xlu0 %v243
    %v245 = vpop.xlane.xlu0 %244
    %v246 = vsel %vm38, %v240, 0.0
    %247 = vadd.xlane.f32.xlu0 %v246
    %v248 = vpop.xlane.xlu0 %247
    %v249 = vsel %vm38, %v241, 0.0
    %250 = vadd.xlane.f32.xlu0 %v249
    %v251 = vpop.xlane.xlu0 %250
    %v252 = vsel %vm38, %v242, 0.0
    %253 = vadd.xlane.f32.xlu0 %v252
    %v254 = vpop.xlane.xlu0 %253
    %v255 = vrcp.pop 32.0
    %v256 = vmul.f32 32.0, %v255
    %v257 = vsub.f32 1.0, %v256
    %v258 = vmul.f32 %v255, %v257
    %v259 = vadd.f32 %v255, %v258
    %vm260 = vweird.f32 %v255
    %v261 = vsel %vm260, %v255, %v259
    %v262 = vmul.f32 %v245, %v261
    %v263 = vmul.f32 %v248, %v261
    %v264 = vmul.f32 %v251, %v261
    %v265 = vmul.f32 %v254, %v261
    %v266 = vsub.f32 %v239, %v262
    %v267 = vsub.f32 %v240, %v263
    %v268 = vsub.f32 %v241, %v264
    %v269 = vsub.f32 %v242, %v265
    %v270 = vmul.f32 %v266, %v266
    %v271 = vmul.f32 %v267, %v267
    %v272 = vmul.f32 %v268, %v268
    %v273 = vmul.f32 %v269, %v269
    %v274 = vsel %vm38, %v270, 0.0
    %275 = vadd.xlane.f32.xlu0 %v274
    %v276 = vpop.xlane.xlu0 %275
    %v277 = vsel %vm38, %v271, 0.0
    %278 = vadd.xlane.f32.xlu0 %v277
    %v279 = vpop.xlane.xlu0 %278
    %v280 = vsel %vm38, %v272, 0.0
    %281 = vadd.xlane.f32.xlu0 %v280
    %v282 = vpop.xlane.xlu0 %281
    %v283 = vsel %vm38, %v273, 0.0
    %284 = vadd.xlane.f32.xlu0 %v283
    %v285 = vpop.xlane.xlu0 %284
    %v286 = vmul.f32 %v276, %v261
    %v287 = vmul.f32 %v279, %v261
    %v288 = vmul.f32 %v282, %v261
    %v289 = vmul.f32 %v285, %v261
    %v290 = vadd.f32 %v286, 1e-05
    %v291 = vadd.f32 %v287, 1e-05
    %v292 = vadd.f32 %v288, 1e-05
    %v293 = vadd.f32 %v289, 1e-05
    %v294 = vrsqrt.pop %v290
    %v295 = vmul.f32 %v294, %v290
    %v296 = vmul.f32 %v295, %v294
    %v297 = vmul.f32 0.5, %v296
    %v298 = vsub.f32 1.5, %v297
    %v299 = vmul.f32 %v294, %v298
    %vm300 = vweird.f32 %v290
    %vm301 = vweird.f32 %v294
    %vm302 = vmor %vm300, %vm301
    %v303 = vsel %vm302, %v294, %v299
    %v304 = vrsqrt.pop %v291
    %v305 = vmul.f32 %v304, %v291
    %v306 = vmul.f32 %v305, %v304
    %v307 = vmul.f32 0.5, %v306
    %v308 = vsub.f32 1.5, %v307
    %v309 = vmul.f32 %v304, %v308
    %vm310 = vweird.f32 %v291
    %vm311 = vweird.f32 %v304
    %vm312 = vmor %vm310, %vm311
    %v313 = vsel %vm312, %v304, %v309
    %v314 = vrsqrt.pop %v292
    %v315 = vmul.f32 %v314, %v292
    %v316 = vmul.f32 %v315, %v314
    %v317 = vmul.f32 0.5, %v316
    %v318 = vsub.f32 1.5, %v317
    %v319 = vmul.f32 %v314, %v318
    %vm320 = vweird.f32 %v292
    %vm321 = vweird.f32 %v314
    %vm322 = vmor %vm320, %vm321
    %v323 = vsel %vm322, %v314, %v319
    %v324 = vrsqrt.pop %v293
    %v325 = vmul.f32 %v324, %v293
    %v326 = vmul.f32 %v325, %v324
    %v327 = vmul.f32 0.5, %v326
    %v328 = vsub.f32 1.5, %v327
    %v329 = vmul.f32 %v324, %v328
    %vm330 = vweird.f32 %v293
    %vm331 = vweird.f32 %v324
    %vm332 = vmor %vm330, %vm331
    %v333 = vsel %vm332, %v324, %v329
    %v334 = vmul.f32 %v266, %v303
    %v335 = vmul.f32 %v267, %v313
    %v336 = vmul.f32 %v268, %v323
    %v337 = vmul.f32 %v269, %v333
    %v338 = vperm.slane %v31, 1
    %v339 = vmul.f32 %v334, %v338
    %v340 = vmul.f32 %v335, %v338
    %v341 = vmul.f32 %v336, %v338
    %v342 = vmul.f32 %v337, %v338
    %v343 = vperm.slane %v31, 2
    %v344 = vadd.f32 %v339, %v343
    %v345 = vadd.f32 %v340, %v343
    %v346 = vadd.f32 %v341, %v343
    %v347 = vadd.f32 %v342, %v343
    %v348 = vld [vmem:[%s3] sm:$0xff]
    %v349 = vld [vmem:[%s3 + $0x8] sm:$0xff]
    %v350 = vld [vmem:[%s3 + $0x10] sm:$0xff]
    %v351 = vld [vmem:[%s3 + $0x18] sm:$0xff]
    %v352 = vperm.slane %v32, 1
    %v354 = vsel %vm38, %v344, 0
    %v357 = vsel %vm38, %v345, 0
    %v360 = vsel %vm38, %v346, 0
    %v363 = vsel %vm38, %v347, 0
    %365 = vmatpush.msra.mxu0 0.0
    %366 = vmatpush.msra.mxu0 0.0
    %367 = vmatpush.msra.mxu0 0.0
    %368 = vmatpush.msra.mxu0 0.0
    %369 = vmatpush.msra.mxu0 0.0
    %370 = vmatpush.msra.mxu0 0.0
    %371 = vmatpush.msra.mxu0 0.0
    %372 = vmatpush.msra.mxu0 0.0
    %373 = vmatpush.msra.mxu0 0.0
    %374 = vmatpush.msra.mxu0 0.0
    %375 = vmatpush.msra.mxu0 0.0
    %376 = vmatpush.msra.mxu0 0.0
    %377 = vmatpush.msra.mxu0 %v351
    %378 = vmatpush.msra.mxu0 %v350
    %379 = vmatpush.msra.mxu0 %v349
    %380 = vmatpush.msra.mxu0 %v348
    %381 = vmatmul.f32.gmra.mxu0 %v354
    %v382 = vpop.f32.mrf.mxu0
    %v383 = vadd.f32 %v352, %v382
    %384 = vmatmul.f32.gmra.mxu0 %v357
    %v385 = vpop.f32.mrf.mxu0
    %v386 = vadd.f32 %v352, %v385
    %387 = vmatmul.f32.gmra.mxu0 %v360
    %v388 = vpop.f32.mrf.mxu0
    %v389 = vadd.f32 %v352, %v388
    %390 = vmatmul.f32.gmra.mxu0 %v363
    %v391 = vpop.f32.mrf.mxu0
    %v392 = vadd.f32 %v352, %v391
    %393 = vdwg.mxu0
    %v394 = vmul.f32 %v383, 0.5
    %v395 = vmul.f32 %v386, 0.5
    %v396 = vmul.f32 %v389, 0.5
    %v397 = vmul.f32 %v392, 0.5
    %v398 = vmul.f32 %v383, 0.70710677
    %v399 = vmul.f32 %v386, 0.70710677
    %v400 = vmul.f32 %v389, 0.70710677
    %v401 = vmul.f32 %v392, 0.70710677
    %v402 = vmul.f32 %v398, %v398
    %v403 = vmin.f32 16.0, %v402
    %v404 = vmul.f32 %v403, 2.1237322e-06
    %v405 = vadd.f32 %v404, 0.00028619796
    %v406 = vmul.f32 %v403, %v405
    %v407 = vadd.f32 %v406, 0.0036580483
    %v408 = vmul.f32 %v403, %v407
    %v409 = vadd.f32 %v408, 0.05243302
    %v410 = vmul.f32 %v403, %v409
    %v411 = vadd.f32 %v410, 0.18741608
    %v412 = vmul.f32 %v403, %v411
    %v413 = vadd.f32 %v412, 1.1283791
    %v414 = vmul.f32 %v398, %v413
    %v415 = vmul.f32 %v403, 3.8918573e-05
    %v416 = vadd.f32 %v415, 0.001143296
    %v417 = vmul.f32 %v403, %v416
    %v418 = vadd.f32 %v417, 0.014752088
    %v419 = vmul.f32 %v403, %v418
    %v420 = vadd.f32 %v419, 0.112945676
    %v421 = vmul.f32 %v403, %v420
    %v422 = vadd.f32 %v421, 0.4994258
    %v423 = vmul.f32 %v403, %v422
    %v424 = vadd.f32 %v423, 1.0
    %v425 = vrcp.pop %v424
    %v426 = vmul.f32 %v424, %v425
    %v427 = vsub.f32 1.0, %v426
    %v428 = vmul.f32 %v425, %v427
    %v429 = vadd.f32 %v425, %v428
    %vm430 = vweird.f32 %v424
    %vm431 = vweird.f32 %v425
    %vm432 = vmor %vm430, %vm431
    %v433 = vsel %vm432, %v425, %v429
    %v434 = vand.u32 2147483647, %v424
    %vm435 = vcmp.eq.f32.partialorder %v434, 8.507059e+37
    %v436 = vand.u32 %v424, 2147483648
    %v437 = vor.u32 1.1754944e-38, %v436
    %v438 = vsel %vm435, %v437, %v433
    %v439 = vmul.f32 %v414, %v438
    %v440 = vmin.f32 %v439, 1.0
    %v441 = vmax.f32 %v440, -1.0
    %v442 = vmul.f32 %v399, %v399
    %v443 = vmin.f32 16.0, %v442
    %v444 = vmul.f32 %v443, 2.1237322e-06
    %v445 = vadd.f32 %v444, 0.00028619796
    %v446 = vmul.f32 %v443, %v445
    %v447 = vadd.f32 %v446, 0.0036580483
    %v448 = vmul.f32 %v443, %v447
    %v449 = vadd.f32 %v448, 0.05243302
    %v450 = vmul.f32 %v443, %v449
    %v451 = vadd.f32 %v450, 0.18741608
    %v452 = vmul.f32 %v443, %v451
    %v453 = vadd.f32 %v452, 1.1283791
    %v454 = vmul.f32 %v399, %v453
    %v455 = vmul.f32 %v443, 3.8918573e-05
    %v456 = vadd.f32 %v455, 0.001143296
    %v457 = vmul.f32 %v443, %v456
    %v458 = vadd.f32 %v457, 0.014752088
    %v459 = vmul.f32 %v443, %v458
    %v460 = vadd.f32 %v459, 0.112945676
    %v461 = vmul.f32 %v443, %v460
    %v462 = vadd.f32 %v461, 0.4994258
    %v463 = vmul.f32 %v443, %v462
    %v464 = vadd.f32 %v463, 1.0
    %v465 = vrcp.pop %v464
    %v466 = vmul.f32 %v464, %v465
    %v467 = vsub.f32 1.0, %v466
    %v468 = vmul.f32 %v465, %v467
    %v469 = vadd.f32 %v465, %v468
    %vm470 = vweird.f32 %v464
    %vm471 = vweird.f32 %v465
    %vm472 = vmor %vm470, %vm471
    %v473 = vsel %vm472, %v465, %v469
    %v474 = vand.u32 2147483647, %v464
    %vm475 = vcmp.eq.f32.partialorder %v474, 8.507059e+37
    %v476 = vand.u32 %v464, 2147483648
    %v477 = vor.u32 1.1754944e-38, %v476
    %v478 = vsel %vm475, %v477, %v473
    %v479 = vmul.f32 %v454, %v478
    %v480 = vmin.f32 %v479, 1.0
    %v481 = vmax.f32 %v480, -1.0
    %v482 = vmul.f32 %v400, %v400
    %v483 = vmin.f32 16.0, %v482
    %v484 = vmul.f32 %v483, 2.1237322e-06
    %v485 = vadd.f32 %v484, 0.00028619796
    %v486 = vmul.f32 %v483, %v485
    %v487 = vadd.f32 %v486, 0.0036580483
    %v488 = vmul.f32 %v483, %v487
    %v489 = vadd.f32 %v488, 0.05243302
    %v490 = vmul.f32 %v483, %v489
    %v491 = vadd.f32 %v490, 0.18741608
    %v492 = vmul.f32 %v483, %v491
    %v493 = vadd.f32 %v492, 1.1283791
    %v494 = vmul.f32 %v400, %v493
    %v495 = vmul.f32 %v483, 3.8918573e-05
    %v496 = vadd.f32 %v495, 0.001143296
    %v497 = vmul.f32 %v483, %v496
    %v498 = vadd.f32 %v497, 0.014752088
    %v499 = vmul.f32 %v483, %v498
    %v500 = vadd.f32 %v499, 0.112945676
    %v501 = vmul.f32 %v483, %v500
    %v502 = vadd.f32 %v501, 0.4994258
    %v503 = vmul.f32 %v483, %v502
    %v504 = vadd.f32 %v503, 1.0
    %v505 = vrcp.pop %v504
    %v506 = vmul.f32 %v504, %v505
    %v507 = vsub.f32 1.0, %v506
    %v508 = vmul.f32 %v505, %v507
    %v509 = vadd.f32 %v505, %v508
    %vm510 = vweird.f32 %v504
    %vm511 = vweird.f32 %v505
    %vm512 = vmor %vm510, %vm511
    %v513 = vsel %vm512, %v505, %v509
    %v514 = vand.u32 2147483647, %v504
    %vm515 = vcmp.eq.f32.partialorder %v514, 8.507059e+37
    %v516 = vand.u32 %v504, 2147483648
    %v517 = vor.u32 1.1754944e-38, %v516
    %v518 = vsel %vm515, %v517, %v513
    %v519 = vmul.f32 %v494, %v518
    %v520 = vmin.f32 %v519, 1.0
    %v521 = vmax.f32 %v520, -1.0
    %v522 = vmul.f32 %v401, %v401
    %v523 = vmin.f32 16.0, %v522
    %v524 = vmul.f32 %v523, 2.1237322e-06
    %v525 = vadd.f32 %v524, 0.00028619796
    %v526 = vmul.f32 %v523, %v525
    %v527 = vadd.f32 %v526, 0.0036580483
    %v528 = vmul.f32 %v523, %v527
    %v529 = vadd.f32 %v528, 0.05243302
    %v530 = vmul.f32 %v523, %v529
    %v531 = vadd.f32 %v530, 0.18741608
    %v532 = vmul.f32 %v523, %v531
    %v533 = vadd.f32 %v532, 1.1283791
    %v534 = vmul.f32 %v401, %v533
    %v535 = vmul.f32 %v523, 3.8918573e-05
    %v536 = vadd.f32 %v535, 0.001143296
    %v537 = vmul.f32 %v523, %v536
    %v538 = vadd.f32 %v537, 0.014752088
    %v539 = vmul.f32 %v523, %v538
    %v540 = vadd.f32 %v539, 0.112945676
    %v541 = vmul.f32 %v523, %v540
    %v542 = vadd.f32 %v541, 0.4994258
    %v543 = vmul.f32 %v523, %v542
    %v544 = vadd.f32 %v543, 1.0
    %v545 = vrcp.pop %v544
    %v546 = vmul.f32 %v544, %v545
    %v547 = vsub.f32 1.0, %v546
    %v548 = vmul.f32 %v545, %v547
    %v549 = vadd.f32 %v545, %v548
    %vm550 = vweird.f32 %v544
    %vm551 = vweird.f32 %v545
    %vm552 = vmor %vm550, %vm551
    %v553 = vsel %vm552, %v545, %v549
    %v554 = vand.u32 2147483647, %v544
    %vm555 = vcmp.eq.f32.partialorder %v554, 8.507059e+37
    %v556 = vand.u32 %v544, 2147483648
    %v557 = vor.u32 1.1754944e-38, %v556
    %v558 = vsel %vm555, %v557, %v553
    %v559 = vmul.f32 %v534, %v558
    %v560 = vmin.f32 %v559, 1.0
    %v561 = vmax.f32 %v560, -1.0
    %v562 = vadd.f32 %v441, 1.0
    %v563 = vadd.f32 %v481, 1.0
    %v564 = vadd.f32 %v521, 1.0
    %v565 = vadd.f32 %v561, 1.0
    %v566 = vmul.f32 %v394, %v562
    %v567 = vmul.f32 %v395, %v563
    %v568 = vmul.f32 %v396, %v564
    %v569 = vmul.f32 %v397, %v565
    %v570 = vld [vmem:[%s4] sm:$0xff]
    %v571 = vld [vmem:[%s4 + $0x8] sm:$0xff]
    %v572 = vld [vmem:[%s4 + $0x10] sm:$0xff]
    %v573 = vld [vmem:[%s4 + $0x18] sm:$0xff]
    %v574 = vld [vmem:[%s4 + $0x20] sm:$0xff]
    %v575 = vld [vmem:[%s4 + $0x28] sm:$0xff]
    %v576 = vld [vmem:[%s4 + $0x30] sm:$0xff]
    %v577 = vld [vmem:[%s4 + $0x38] sm:$0xff]
    %v578 = vld [vmem:[%s4 + $0x40] sm:$0xff]
    %v579 = vld [vmem:[%s4 + $0x48] sm:$0xff]
    %v580 = vld [vmem:[%s4 + $0x50] sm:$0xff]
    %v581 = vld [vmem:[%s4 + $0x58] sm:$0xff]
    %v582 = vld [vmem:[%s4 + $0x60] sm:$0xff]
    %v583 = vld [vmem:[%s4 + $0x68] sm:$0xff]
    %v584 = vld [vmem:[%s4 + $0x70] sm:$0xff]
    %v585 = vld [vmem:[%s4 + $0x78] sm:$0xff]
    %v586 = vperm.slane %v31, 3
    %587 = vmatpush.msra.mxu0 %v585
    %588 = vmatpush.msra.mxu0 %v584
    %589 = vmatpush.msra.mxu0 %v583
    %590 = vmatpush.msra.mxu0 %v582
    %591 = vmatpush.msra.mxu0 %v581
    %592 = vmatpush.msra.mxu0 %v580
    %593 = vmatpush.msra.mxu0 %v579
    %594 = vmatpush.msra.mxu0 %v578
    %595 = vmatpush.msra.mxu0 %v577
    %596 = vmatpush.msra.mxu0 %v576
    %597 = vmatpush.msra.mxu0 %v575
    %598 = vmatpush.msra.mxu0 %v574
    %599 = vmatpush.msra.mxu0 %v573
    %600 = vmatpush.msra.mxu0 %v572
    %601 = vmatpush.msra.mxu0 %v571
    %602 = vmatpush.msra.mxu0 %v570
    %603 = vmatmul.f32.gmra.mxu0 %v566
    %v604 = vpop.f32.mrf.mxu0
    %v605 = vadd.f32 %v586, %v604
    %606 = vmatmul.f32.gmra.mxu0 %v567
    %v607 = vpop.f32.mrf.mxu0
    %v608 = vadd.f32 %v586, %v607
    %609 = vmatmul.f32.gmra.mxu0 %v568
    %v610 = vpop.f32.mrf.mxu0
    %v611 = vadd.f32 %v586, %v610
    %612 = vmatmul.f32.gmra.mxu0 %v569
    %v613 = vpop.f32.mrf.mxu0
    %v614 = vadd.f32 %v586, %v613
    %615 = vdwg.mxu0
    %v616 = vadd.f32 %v344, %v605
    %v617 = vadd.f32 %v345, %v608
    %v618 = vadd.f32 %v346, %v611
    %v619 = vadd.f32 %v347, %v614
    %v620 = vsel %vm38, %v616, 0.0
    %621 = vadd.xlane.f32.xlu0 %v620
    %v622 = vpop.xlane.xlu0 %621
    %v623 = vsel %vm38, %v617, 0.0
    %624 = vadd.xlane.f32.xlu0 %v623
    %v625 = vpop.xlane.xlu0 %624
    %v626 = vsel %vm38, %v618, 0.0
    %627 = vadd.xlane.f32.xlu0 %v626
    %v628 = vpop.xlane.xlu0 %627
    %v629 = vsel %vm38, %v619, 0.0
    %630 = vadd.xlane.f32.xlu0 %v629
    %v631 = vpop.xlane.xlu0 %630
    %v632 = vmul.f32 %v622, %v261
    %v633 = vmul.f32 %v625, %v261
    %v634 = vmul.f32 %v628, %v261
    %v635 = vmul.f32 %v631, %v261
    %v636 = vsub.f32 %v616, %v632
    %v637 = vsub.f32 %v617, %v633
    %v638 = vsub.f32 %v618, %v634
    %v639 = vsub.f32 %v619, %v635
    %v640 = vmul.f32 %v636, %v636
    %v641 = vmul.f32 %v637, %v637
    %v642 = vmul.f32 %v638, %v638
    %v643 = vmul.f32 %v639, %v639
    %v644 = vsel %vm38, %v640, 0.0
    %645 = vadd.xlane.f32.xlu0 %v644
    %v646 = vpop.xlane.xlu0 %645
    %v647 = vsel %vm38, %v641, 0.0
    %648 = vadd.xlane.f32.xlu0 %v647
    %v649 = vpop.xlane.xlu0 %648
    %v650 = vsel %vm38, %v642, 0.0
    %651 = vadd.xlane.f32.xlu0 %v650
    %v652 = vpop.xlane.xlu0 %651
    %v653 = vsel %vm38, %v643, 0.0
    %654 = vadd.xlane.f32.xlu0 %v653
    %v655 = vpop.xlane.xlu0 %654
    %v656 = vmul.f32 %v646, %v261
    %v657 = vmul.f32 %v649, %v261
    %v658 = vmul.f32 %v652, %v261
    %v659 = vmul.f32 %v655, %v261
    %v660 = vadd.f32 %v656, 1e-05
    %v661 = vadd.f32 %v657, 1e-05
    %v662 = vadd.f32 %v658, 1e-05
    %v663 = vadd.f32 %v659, 1e-05
    %v664 = vrsqrt.pop %v660
    %v665 = vmul.f32 %v664, %v660
    %v666 = vmul.f32 %v665, %v664
    %v667 = vmul.f32 0.5, %v666
    %v668 = vsub.f32 1.5, %v667
    %v669 = vmul.f32 %v664, %v668
    %vm670 = vweird.f32 %v660
    %vm671 = vweird.f32 %v664
    %vm672 = vmor %vm670, %vm671
    %v673 = vsel %vm672, %v664, %v669
    %v674 = vrsqrt.pop %v661
    %v675 = vmul.f32 %v674, %v661
    %v676 = vmul.f32 %v675, %v674
    %v677 = vmul.f32 0.5, %v676
    %v678 = vsub.f32 1.5, %v677
    %v679 = vmul.f32 %v674, %v678
    %vm680 = vweird.f32 %v661
    %vm681 = vweird.f32 %v674
    %vm682 = vmor %vm680, %vm681
    %v683 = vsel %vm682, %v674, %v679
    %v684 = vrsqrt.pop %v662
    %v685 = vmul.f32 %v684, %v662
    %v686 = vmul.f32 %v685, %v684
    %v687 = vmul.f32 0.5, %v686
    %v688 = vsub.f32 1.5, %v687
    %v689 = vmul.f32 %v684, %v688
    %vm690 = vweird.f32 %v662
    %vm691 = vweird.f32 %v684
    %vm692 = vmor %vm690, %vm691
    %v693 = vsel %vm692, %v684, %v689
    %v694 = vrsqrt.pop %v663
    %v695 = vmul.f32 %v694, %v663
    %v696 = vmul.f32 %v695, %v694
    %v697 = vmul.f32 0.5, %v696
    %v698 = vsub.f32 1.5, %v697
    %v699 = vmul.f32 %v694, %v698
    %vm700 = vweird.f32 %v663
    %vm701 = vweird.f32 %v694
    %vm702 = vmor %vm700, %vm701
    %v703 = vsel %vm702, %v694, %v699
    %v704 = vmul.f32 %v636, %v673
    %v705 = vmul.f32 %v637, %v683
    %v706 = vmul.f32 %v638, %v693
    %v707 = vmul.f32 %v639, %v703
    %v708 = vperm.slane %v31, 4
    %v709 = vmul.f32 %v704, %v708
    %v710 = vmul.f32 %v705, %v708
    %v711 = vmul.f32 %v706, %v708
    %v712 = vmul.f32 %v707, %v708
    %v713 = vperm.slane %v31, 5
    %v714 = vadd.f32 %v709, %v713
    %v715 = vadd.f32 %v710, %v713
    %v716 = vadd.f32 %v711, %v713
    %v717 = vadd.f32 %v712, %v713
    %718 = vst.msk [vmem:[#allocation2] sm:$0xff] %vm38, %v714
    %719 = vst.msk [vmem:[#allocation2 + $0x8] sm:$0xff] %vm38, %v715
    %720 = vst.msk [vmem:[#allocation2 + $0x10] sm:$0xff] %vm38, %v716
    %721 = vst.msk [vmem:[#allocation2 + $0x18] sm:$0xff] %vm38, %v717
    // Predicated region
    $region30: #{tpu_custom_call.1} parent=1 // pred_check
      _
    $region31: #{tpu_custom_call.1} parent=1 // pred_check_branch
      %723 = sbr.rel (0) target = $region33
    $region32: #{tpu_custom_call.1} parent=1 // pred_region
      %725 = vsyncadd [#allocation3], 0
      %s726 = sshll.u32 [#allocation2], 4
      %s727 = int_to_ptr.vmem [resolvable:$true] %s726
      %s728 = sshll.u32 %s7, 4
      %s729 = int_to_ptr.hbm [resolvable:$true] %s728
      %734 = dma.vmem_to_hbm [thread:$0]  %s727, 512, %s729, [#allocation3], 128, 128, 8
    $region33: #{tpu_custom_call.1} parent=1 // pred_fallthru
      _
    // Predicated region
    $region34: #{tpu_custom_call.1} parent=1 // pred_check
      _
    $region35: #{tpu_custom_call.1} parent=1 // pred_check_branch
      %736 = sbr.rel (0) target = $region37
    $region36: #{tpu_custom_call.1} parent=1 // pred_region
      %738 = dma.done [#allocation3], 512
    $region37: #{tpu_custom_call.1} parent=1 // pred_fallthru
      _
    %739 = vsyncpa [#allocation3], 1

// kernel: tpu_custom_call.1
$region0: #{tpu_custom_call.1}
  #allocation0 [shape = 'u32[]', space=smem, size = 0x4, offset = 0x4, fixed_abs, tag = 'smem constant byte address 0x4 - core index']
  #allocation1 [shape = 'u32[72,128]{1,0:T(1,128)}', space=vmem, size = 0x9000, scoped, tag = 'internal scratch']
  %s0 = inlined_call_operand.vmem [shape: f32[32,32], index: 0, kind: input, shape index: {}]
  %s1 = inlined_call_operand.vmem [shape: f32[32,32], index: 1, kind: input, shape index: {}]
  %s2 = inlined_call_operand.vmem [shape: f32[32,96], index: 2, kind: input, shape index: {}]
  %s3 = inlined_call_operand.vmem [shape: f32[32,128], index: 3, kind: input, shape index: {}]
  %s4 = inlined_call_operand.vmem [shape: f32[128,32], index: 4, kind: input, shape index: {}]
  %s5 = inlined_call_operand.vmem [shape: f32[6,32], index: 5, kind: input, shape index: {}]
  %s6 = inlined_call_operand.vmem [shape: f32[2,128], index: 6, kind: input, shape index: {}]
  %s7 = inlined_call_operand.hbm [shape: f32[32,32], index: 7, kind: output, shape index: {}]
  %s8 = sld [smem:[#allocation0]]
  $region38: #{tpu_custom_call.1} parent=0
    _
  %s10 = ssub.s32 1, %s8
  %s11 = scalar_select 0, %s10, %s8
  $region1: #{tpu_custom_call.1} parent=0
    #allocation2 [shape = 'u8[16384]{0}', space=vmem, size = 0x4000, scoped, tag = 'output window, operand 0, single buffered']
    #allocation3 [shape = 's32[1]{0}', space=sflag, size = 0x4, scoped, tag = 'scoped memory for tpu_custom_call.1']
    %12 = vsyncpa [#allocation3], 0
    // Predicated region
    $region2: #{tpu_custom_call.1} parent=1 // pred_check
      _
    $region3: #{tpu_custom_call.1} parent=1 // pred_check_branch
      %14 = sbr.rel (0) target = $region5
    $region4: #{tpu_custom_call.1} parent=1 // pred_region
      _
    $region5: #{tpu_custom_call.1} parent=1 // pred_fallthru
      _
    // Predicated region
    $region6: #{tpu_custom_call.1} parent=1 // pred_check
      _
    $region7: #{tpu_custom_call.1} parent=1 // pred_check_branch
      %16 = sbr.rel (0) target = $region9
    $region8: #{tpu_custom_call.1} parent=1 // pred_region
      _
    $region9: #{tpu_custom_call.1} parent=1 // pred_fallthru
      _
    // Predicated region
    $region10: #{tpu_custom_call.1} parent=1 // pred_check
      _
    $region11: #{tpu_custom_call.1} parent=1 // pred_check_branch
      %18 = sbr.rel (0) target = $region13
    $region12: #{tpu_custom_call.1} parent=1 // pred_region
      _
    $region13: #{tpu_custom_call.1} parent=1 // pred_fallthru
      _
    // Predicated region
    $region14: #{tpu_custom_call.1} parent=1 // pred_check
      _
    $region15: #{tpu_custom_call.1} parent=1 // pred_check_branch
      %20 = sbr.rel (0) target = $region17
    $region16: #{tpu_custom_call.1} parent=1 // pred_region
      _
    $region17: #{tpu_custom_call.1} parent=1 // pred_fallthru
      _
    // Predicated region
    $region18: #{tpu_custom_call.1} parent=1 // pred_check
      _
    $region19: #{tpu_custom_call.1} parent=1 // pred_check_branch
      %22 = sbr.rel (0) target = $region21
    $region20: #{tpu_custom_call.1} parent=1 // pred_region
      _
    $region21: #{tpu_custom_call.1} parent=1 // pred_fallthru
      _
    // Predicated region
    $region22: #{tpu_custom_call.1} parent=1 // pred_check
      _
    $region23: #{tpu_custom_call.1} parent=1 // pred_check_branch
      %24 = sbr.rel (0) target = $region25
    $region24: #{tpu_custom_call.1} parent=1 // pred_region
      _
    $region25: #{tpu_custom_call.1} parent=1 // pred_fallthru
      _
    // Predicated region
    $region26: #{tpu_custom_call.1} parent=1 // pred_check
      _
    $region27: #{tpu_custom_call.1} parent=1 // pred_check_branch
      %26 = sbr.rel (0) target = $region29
    $region28: #{tpu_custom_call.1} parent=1 // pred_region
      _
    $region29: #{tpu_custom_call.1} parent=1 // pred_fallthru
      _
    %v27 = vld [vmem:[%s0] sm:$0xff]
    %v28 = vld [vmem:[%s0 + $0x8] sm:$0xff]
    %v29 = vld [vmem:[%s0 + $0x10] sm:$0xff]
    %v30 = vld [vmem:[%s0 + $0x18] sm:$0xff]
    %v31 = vld [vmem:[%s5] sm:$0x3f]
    %v32 = vld [vmem:[%s6] sm:$0x3]
    %v33 = vld [vmem:[%s2] sm:$0xff]
    %v34 = vld [vmem:[%s2 + $0x8] sm:$0xff]
    %v35 = vld [vmem:[%s2 + $0x10] sm:$0xff]
    %v36 = vld [vmem:[%s2 + $0x18] sm:$0xff]
    %v37 = vperm.slane %v32, 0
    %vm38 = vcmask 261120
    %v40 = vsel %vm38, %v27, 0
    %v43 = vsel %vm38, %v28, 0
    %v46 = vsel %vm38, %v29, 0
    %v49 = vsel %vm38, %v30, 0
    %51 = vmatpush.msra.mxu0 0.0
    %52 = vmatpush.msra.mxu0 0.0
    %53 = vmatpush.msra.mxu0 0.0
    %54 = vmatpush.msra.mxu0 0.0
    %55 = vmatpush.msra.mxu0 0.0
    %56 = vmatpush.msra.mxu0 0.0
    %57 = vmatpush.msra.mxu0 0.0
    %58 = vmatpush.msra.mxu0 0.0
    %59 = vmatpush.msra.mxu0 0.0
    %60 = vmatpush.msra.mxu0 0.0
    %61 = vmatpush.msra.mxu0 0.0
    %62 = vmatpush.msra.mxu0 0.0
    %63 = vmatpush.msra.mxu0 %v36
    %64 = vmatpush.msra.mxu0 %v35
    %65 = vmatpush.msra.mxu0 %v34
    %66 = vmatpush.msra.mxu0 %v33
    %67 = vmatmul.f32.gmra.mxu0 %v40
    %v68 = vpop.f32.mrf.mxu0
    %v69 = vadd.f32 %v37, %v68
    %70 = vmatmul.f32.gmra.mxu0 %v43
    %v71 = vpop.f32.mrf.mxu0
    %v72 = vadd.f32 %v37, %v71
    %73 = vmatmul.f32.gmra.mxu0 %v46
    %v74 = vpop.f32.mrf.mxu0
    %v75 = vadd.f32 %v37, %v74
    %76 = vmatmul.f32.gmra.mxu0 %v49
    %v77 = vpop.f32.mrf.mxu0
    %v78 = vadd.f32 %v37, %v77
    %79 = vdwg.mxu0
    %v80 = vld [vmem:[%s1] sm:$0xff]
    %v81 = vld [vmem:[%s1 + $0x8] sm:$0xff]
    %v82 = vld [vmem:[%s1 + $0x10] sm:$0xff]
    %v83 = vld [vmem:[%s1 + $0x18] sm:$0xff]
    %88 = vrot.lane.b32.xlu0 %v69, 96
    %v89 = vpop.permute.xlu0 %88
    %90 = vrot.lane.b32.xlu0 %v72, 96
    %v91 = vpop.permute.xlu0 %90
    %92 = vrot.lane.b32.xlu0 %v75, 96
    %v93 = vpop.permute.xlu0 %92
    %94 = vrot.lane.b32.xlu0 %v78, 96
    %v95 = vpop.permute.xlu0 %94
    %v96 = vsel %vm38, %v69, 0
    %v98 = vsel %vm38, %v72, 0
    %v100 = vsel %vm38, %v75, 0
    %v102 = vsel %vm38, %v78, 0
    %v104 = vsel %vm38, %v89, 0
    %v106 = vsel %vm38, %v91, 0
    %v108 = vsel %vm38, %v93, 0
    %v110 = vsel %vm38, %v95, 0
    %112 = vmatpush.xpose.msra.mxu0 0.0
    %113 = vmatpush.xpose.msra.mxu0 0.0
    %114 = vmatpush.xpose.msra.mxu0 0.0
    %115 = vmatpush.xpose.msra.mxu0 0.0
    %116 = vmatpush.xpose.msra.mxu0 0.0
    %117 = vmatpush.xpose.msra.mxu0 0.0
    %118 = vmatpush.xpose.msra.mxu0 0.0
    %119 = vmatpush.xpose.msra.mxu0 0.0
    %120 = vmatpush.xpose.msra.mxu0 0.0
    %121 = vmatpush.xpose.msra.mxu0 0.0
    %122 = vmatpush.xpose.msra.mxu0 0.0
    %123 = vmatpush.xpose.msra.mxu0 0.0
    %124 = vmatpush.xpose.msra.mxu0 %v110
    %125 = vmatpush.xpose.msra.mxu0 %v108
    %126 = vmatpush.xpose.msra.mxu0 %v106
    %127 = vmatpush.xpose.msra.mxu0 %v104
    %128 = vmatmul.f32.gmra.mxu0 %v96
    %v129 = vpop.f32.mrf.mxu0
    %v130 = vadd.f32 %v80, %v129
    %131 = vmatmul.f32.gmra.mxu0 %v98
    %v132 = vpop.f32.mrf.mxu0
    %v133 = vadd.f32 %v81, %v132
    %134 = vmatmul.f32.gmra.mxu0 %v100
    %v135 = vpop.f32.mrf.mxu0
    %v136 = vadd.f32 %v82, %v135
    %137 = vmatmul.f32.gmra.mxu0 %v102
    %v138 = vpop.f32.mrf.mxu0
    %v139 = vadd.f32 %v83, %v138
    %140 = vdwg.mxu0
    %v141 = vsel %vm38, %v130, -inf
    %142 = vmax.xlane.f32.xlu0 %v141
    %v143 = vpop.xlane.xlu0 %142
    %v144 = vsel %vm38, %v133, -inf
    %145 = vmax.xlane.f32.xlu0 %v144
    %v146 = vpop.xlane.xlu0 %145
    %v147 = vsel %vm38, %v136, -inf
    %148 = vmax.xlane.f32.xlu0 %v147
    %v149 = vpop.xlane.xlu0 %148
    %v150 = vsel %vm38, %v139, -inf
    %151 = vmax.xlane.f32.xlu0 %v150
    %v152 = vpop.xlane.xlu0 %151
    %v153 = vsub.f32 %v130, %v143
    %v154 = vsub.f32 %v133, %v146
    %v155 = vsub.f32 %v136, %v149
    %v156 = vsub.f32 %v139, %v152
    %v157 = vmul.f32 %v153, 1.442695
    %v158 = vpow.pop %v157
    %v159 = vmul.f32 %v154, 1.442695
    %v160 = vpow.pop %v159
    %v161 = vmul.f32 %v155, 1.442695
    %v162 = vpow.pop %v161
    %v163 = vmul.f32 %v156, 1.442695
    %v164 = vpow.pop %v163
    %v165 = vsel %vm38, %v158, 0.0
    %166 = vadd.xlane.f32.xlu0 %v165
    %v167 = vpop.xlane.xlu0 %166
    %v168 = vsel %vm38, %v160, 0.0
    %169 = vadd.xlane.f32.xlu0 %v168
    %v170 = vpop.xlane.xlu0 %169
    %v171 = vsel %vm38, %v162, 0.0
    %172 = vadd.xlane.f32.xlu0 %v171
    %v173 = vpop.xlane.xlu0 %172
    %v174 = vsel %vm38, %v164, 0.0
    %175 = vadd.xlane.f32.xlu0 %v174
    %v176 = vpop.xlane.xlu0 %175
    %v177 = vrcp.pop %v167
    %v178 = vrcp.pop %v170
    %v179 = vrcp.pop %v173
    %v180 = vrcp.pop %v176
    %v181 = vmul.f32 %v158, %v177
    %v182 = vmul.f32 %v160, %v178
    %v183 = vmul.f32 %v162, %v179
    %v184 = vmul.f32 %v164, %v180
    %v185 = vperm.slane %v31, 0
    %186 = vrot.lane.b32.xlu0 %v69, 64
    %v187 = vpop.permute.xlu0 %186
    %188 = vrot.lane.b32.xlu0 %v72, 64
    %v189 = vpop.permute.xlu0 %188
    %190 = vrot.lane.b32.xlu0 %v75, 64
    %v191 = vpop.permute.xlu0 %190
    %192 = vrot.lane.b32.xlu0 %v78, 64
    %v193 = vpop.permute.xlu0 %192
    %v199 = vsel %vm38, %v181, 0
    %v202 = vsel %vm38, %v182, 0
    %v205 = vsel %vm38, %v183, 0
    %v208 = vsel %vm38, %v184, 0
    %210 = vmatpush.msra.mxu0 0.0
    %211 = vmatpush.msra.mxu0 0.0
    %212 = vmatpush.msra.mxu0 0.0
    %213 = vmatpush.msra.mxu0 0.0
    %214 = vmatpush.msra.mxu0 0.0
    %215 = vmatpush.msra.mxu0 0.0
    %216 = vmatpush.msra.mxu0 0.0
    %217 = vmatpush.msra.mxu0 0.0
    %218 = vmatpush.msra.mxu0 0.0
    %219 = vmatpush.msra.mxu0 0.0
    %220 = vmatpush.msra.mxu0 0.0
    %221 = vmatpush.msra.mxu0 0.0
    %222 = vmatpush.msra.mxu0 %v193
    %223 = vmatpush.msra.mxu0 %v191
    %224 = vmatpush.msra.mxu0 %v189
    %225 = vmatpush.msra.mxu0 %v187
    %226 = vmatmul.f32.gmra.mxu0 %v199
    %v227 = vpop.f32.mrf.mxu0
    %v228 = vadd.f32 %v185, %v227
    %229 = vmatmul.f32.gmra.mxu0 %v202
    %v230 = vpop.f32.mrf.mxu0
    %v231 = vadd.f32 %v185, %v230
    %232 = vmatmul.f32.gmra.mxu0 %v205
    %v233 = vpop.f32.mrf.mxu0
    %v234 = vadd.f32 %v185, %v233
    %235 = vmatmul.f32.gmra.mxu0 %v208
    %v236 = vpop.f32.mrf.mxu0
    %v237 = vadd.f32 %v185, %v236
    %238 = vdwg.mxu0
    %v239 = vadd.f32 %v27, %v228
    %v240 = vadd.f32 %v28, %v231
    %v241 = vadd.f32 %v29, %v234
    %v242 = vadd.f32 %v30, %v237
    %v243 = vsel %vm38, %v239, 0.0
    %244 = vadd.xlane.f32.xlu0 %v243
    %v245 = vpop.xlane.xlu0 %244
    %v246 = vsel %vm38, %v240, 0.0
    %247 = vadd.xlane.f32.xlu0 %v246
    %v248 = vpop.xlane.xlu0 %247
    %v249 = vsel %vm38, %v241, 0.0
    %250 = vadd.xlane.f32.xlu0 %v249
    %v251 = vpop.xlane.xlu0 %250
    %v252 = vsel %vm38, %v242, 0.0
    %253 = vadd.xlane.f32.xlu0 %v252
    %v254 = vpop.xlane.xlu0 %253
    %v255 = vrcp.pop 32.0
    %v256 = vmul.f32 32.0, %v255
    %v257 = vsub.f32 1.0, %v256
    %v258 = vmul.f32 %v255, %v257
    %v259 = vadd.f32 %v255, %v258
    %vm260 = vweird.f32 %v255
    %v261 = vsel %vm260, %v255, %v259
    %v262 = vmul.f32 %v245, %v261
    %v263 = vmul.f32 %v248, %v261
    %v264 = vmul.f32 %v251, %v261
    %v265 = vmul.f32 %v254, %v261
    %v266 = vsub.f32 %v239, %v262
    %v267 = vsub.f32 %v240, %v263
    %v268 = vsub.f32 %v241, %v264
    %v269 = vsub.f32 %v242, %v265
    %v270 = vmul.f32 %v266, %v266
    %v271 = vmul.f32 %v267, %v267
    %v272 = vmul.f32 %v268, %v268
    %v273 = vmul.f32 %v269, %v269
    %v274 = vsel %vm38, %v270, 0.0
    %275 = vadd.xlane.f32.xlu0 %v274
    %v276 = vpop.xlane.xlu0 %275
    %v277 = vsel %vm38, %v271, 0.0
    %278 = vadd.xlane.f32.xlu0 %v277
    %v279 = vpop.xlane.xlu0 %278
    %v280 = vsel %vm38, %v272, 0.0
    %281 = vadd.xlane.f32.xlu0 %v280
    %v282 = vpop.xlane.xlu0 %281
    %v283 = vsel %vm38, %v273, 0.0
    %284 = vadd.xlane.f32.xlu0 %v283
    %v285 = vpop.xlane.xlu0 %284
    %v286 = vmul.f32 %v276, %v261
    %v287 = vmul.f32 %v279, %v261
    %v288 = vmul.f32 %v282, %v261
    %v289 = vmul.f32 %v285, %v261
    %v290 = vadd.f32 %v286, 1e-05
    %v291 = vadd.f32 %v287, 1e-05
    %v292 = vadd.f32 %v288, 1e-05
    %v293 = vadd.f32 %v289, 1e-05
    %v294 = vrsqrt.pop %v290
    %v295 = vmul.f32 %v294, %v290
    %v296 = vmul.f32 %v295, %v294
    %v297 = vmul.f32 0.5, %v296
    %v298 = vsub.f32 1.5, %v297
    %v299 = vmul.f32 %v294, %v298
    %vm300 = vweird.f32 %v290
    %vm301 = vweird.f32 %v294
    %vm302 = vmor %vm300, %vm301
    %v303 = vsel %vm302, %v294, %v299
    %v304 = vrsqrt.pop %v291
    %v305 = vmul.f32 %v304, %v291
    %v306 = vmul.f32 %v305, %v304
    %v307 = vmul.f32 0.5, %v306
    %v308 = vsub.f32 1.5, %v307
    %v309 = vmul.f32 %v304, %v308
    %vm310 = vweird.f32 %v291
    %vm311 = vweird.f32 %v304
    %vm312 = vmor %vm310, %vm311
    %v313 = vsel %vm312, %v304, %v309
    %v314 = vrsqrt.pop %v292
    %v315 = vmul.f32 %v314, %v292
    %v316 = vmul.f32 %v315, %v314
    %v317 = vmul.f32 0.5, %v316
    %v318 = vsub.f32 1.5, %v317
    %v319 = vmul.f32 %v314, %v318
    %vm320 = vweird.f32 %v292
    %vm321 = vweird.f32 %v314
    %vm322 = vmor %vm320, %vm321
    %v323 = vsel %vm322, %v314, %v319
    %v324 = vrsqrt.pop %v293
    %v325 = vmul.f32 %v324, %v293
    %v326 = vmul.f32 %v325, %v324
    %v327 = vmul.f32 0.5, %v326
    %v328 = vsub.f32 1.5, %v327
    %v329 = vmul.f32 %v324, %v328
    %vm330 = vweird.f32 %v293
    %vm331 = vweird.f32 %v324
    %vm332 = vmor %vm330, %vm331
    %v333 = vsel %vm332, %v324, %v329
    %v334 = vmul.f32 %v266, %v303
    %v335 = vmul.f32 %v267, %v313
    %v336 = vmul.f32 %v268, %v323
    %v337 = vmul.f32 %v269, %v333
    %v338 = vperm.slane %v31, 1
    %v339 = vmul.f32 %v334, %v338
    %v340 = vmul.f32 %v335, %v338
    %v341 = vmul.f32 %v336, %v338
    %v342 = vmul.f32 %v337, %v338
    %v343 = vperm.slane %v31, 2
    %v344 = vadd.f32 %v339, %v343
    %v345 = vadd.f32 %v340, %v343
    %v346 = vadd.f32 %v341, %v343
    %v347 = vadd.f32 %v342, %v343
    %v348 = vld [vmem:[%s3] sm:$0xff]
    %v349 = vld [vmem:[%s3 + $0x8] sm:$0xff]
    %v350 = vld [vmem:[%s3 + $0x10] sm:$0xff]
    %v351 = vld [vmem:[%s3 + $0x18] sm:$0xff]
    %v352 = vperm.slane %v32, 1
    %v354 = vsel %vm38, %v344, 0
    %v357 = vsel %vm38, %v345, 0
    %v360 = vsel %vm38, %v346, 0
    %v363 = vsel %vm38, %v347, 0
    %365 = vmatpush.msra.mxu0 0.0
    %366 = vmatpush.msra.mxu0 0.0
    %367 = vmatpush.msra.mxu0 0.0
    %368 = vmatpush.msra.mxu0 0.0
    %369 = vmatpush.msra.mxu0 0.0
    %370 = vmatpush.msra.mxu0 0.0
    %371 = vmatpush.msra.mxu0 0.0
    %372 = vmatpush.msra.mxu0 0.0
    %373 = vmatpush.msra.mxu0 0.0
    %374 = vmatpush.msra.mxu0 0.0
    %375 = vmatpush.msra.mxu0 0.0
    %376 = vmatpush.msra.mxu0 0.0
    %377 = vmatpush.msra.mxu0 %v351
    %378 = vmatpush.msra.mxu0 %v350
    %379 = vmatpush.msra.mxu0 %v349
    %380 = vmatpush.msra.mxu0 %v348
    %381 = vmatmul.f32.gmra.mxu0 %v354
    %v382 = vpop.f32.mrf.mxu0
    %v383 = vadd.f32 %v352, %v382
    %384 = vmatmul.f32.gmra.mxu0 %v357
    %v385 = vpop.f32.mrf.mxu0
    %v386 = vadd.f32 %v352, %v385
    %387 = vmatmul.f32.gmra.mxu0 %v360
    %v388 = vpop.f32.mrf.mxu0
    %v389 = vadd.f32 %v352, %v388
    %390 = vmatmul.f32.gmra.mxu0 %v363
    %v391 = vpop.f32.mrf.mxu0
    %v392 = vadd.f32 %v352, %v391
    %393 = vdwg.mxu0
    %v394 = vmul.f32 %v383, 0.5
    %v395 = vmul.f32 %v386, 0.5
    %v396 = vmul.f32 %v389, 0.5
    %v397 = vmul.f32 %v392, 0.5
    %v398 = vmul.f32 %v383, 0.70710677
    %v399 = vmul.f32 %v386, 0.70710677
    %v400 = vmul.f32 %v389, 0.70710677
    %v401 = vmul.f32 %v392, 0.70710677
    %v402 = vmul.f32 %v398, %v398
    %v403 = vmin.f32 16.0, %v402
    %v404 = vmul.f32 %v403, 2.1237322e-06
    %v405 = vadd.f32 %v404, 0.00028619796
    %v406 = vmul.f32 %v403, %v405
    %v407 = vadd.f32 %v406, 0.0036580483
    %v408 = vmul.f32 %v403, %v407
    %v409 = vadd.f32 %v408, 0.05243302
    %v410 = vmul.f32 %v403, %v409
    %v411 = vadd.f32 %v410, 0.18741608
    %v412 = vmul.f32 %v403, %v411
    %v413 = vadd.f32 %v412, 1.1283791
    %v414 = vmul.f32 %v398, %v413
    %v415 = vmul.f32 %v403, 3.8918573e-05
    %v416 = vadd.f32 %v415, 0.001143296
    %v417 = vmul.f32 %v403, %v416
    %v418 = vadd.f32 %v417, 0.014752088
    %v419 = vmul.f32 %v403, %v418
    %v420 = vadd.f32 %v419, 0.112945676
    %v421 = vmul.f32 %v403, %v420
    %v422 = vadd.f32 %v421, 0.4994258
    %v423 = vmul.f32 %v403, %v422
    %v424 = vadd.f32 %v423, 1.0
    %v425 = vrcp.pop %v424
    %v426 = vmul.f32 %v424, %v425
    %v427 = vsub.f32 1.0, %v426
    %v428 = vmul.f32 %v425, %v427
    %v429 = vadd.f32 %v425, %v428
    %vm430 = vweird.f32 %v424
    %vm431 = vweird.f32 %v425
    %vm432 = vmor %vm430, %vm431
    %v433 = vsel %vm432, %v425, %v429
    %v434 = vand.u32 2147483647, %v424
    %vm435 = vcmp.eq.f32.partialorder %v434, 8.507059e+37
    %v436 = vand.u32 %v424, 2147483648
    %v437 = vor.u32 1.1754944e-38, %v436
    %v438 = vsel %vm435, %v437, %v433
    %v439 = vmul.f32 %v414, %v438
    %v440 = vmin.f32 %v439, 1.0
    %v441 = vmax.f32 %v440, -1.0
    %v442 = vmul.f32 %v399, %v399
    %v443 = vmin.f32 16.0, %v442
    %v444 = vmul.f32 %v443, 2.1237322e-06
    %v445 = vadd.f32 %v444, 0.00028619796
    %v446 = vmul.f32 %v443, %v445
    %v447 = vadd.f32 %v446, 0.0036580483
    %v448 = vmul.f32 %v443, %v447
    %v449 = vadd.f32 %v448, 0.05243302
    %v450 = vmul.f32 %v443, %v449
    %v451 = vadd.f32 %v450, 0.18741608
    %v452 = vmul.f32 %v443, %v451
    %v453 = vadd.f32 %v452, 1.1283791
    %v454 = vmul.f32 %v399, %v453
    %v455 = vmul.f32 %v443, 3.8918573e-05
    %v456 = vadd.f32 %v455, 0.001143296
    %v457 = vmul.f32 %v443, %v456
    %v458 = vadd.f32 %v457, 0.014752088
    %v459 = vmul.f32 %v443, %v458
    %v460 = vadd.f32 %v459, 0.112945676
    %v461 = vmul.f32 %v443, %v460
    %v462 = vadd.f32 %v461, 0.4994258
    %v463 = vmul.f32 %v443, %v462
    %v464 = vadd.f32 %v463, 1.0
    %v465 = vrcp.pop %v464
    %v466 = vmul.f32 %v464, %v465
    %v467 = vsub.f32 1.0, %v466
    %v468 = vmul.f32 %v465, %v467
    %v469 = vadd.f32 %v465, %v468
    %vm470 = vweird.f32 %v464
    %vm471 = vweird.f32 %v465
    %vm472 = vmor %vm470, %vm471
    %v473 = vsel %vm472, %v465, %v469
    %v474 = vand.u32 2147483647, %v464
    %vm475 = vcmp.eq.f32.partialorder %v474, 8.507059e+37
    %v476 = vand.u32 %v464, 2147483648
    %v477 = vor.u32 1.1754944e-38, %v476
    %v478 = vsel %vm475, %v477, %v473
    %v479 = vmul.f32 %v454, %v478
    %v480 = vmin.f32 %v479, 1.0
    %v481 = vmax.f32 %v480, -1.0
    %v482 = vmul.f32 %v400, %v400
    %v483 = vmin.f32 16.0, %v482
    %v484 = vmul.f32 %v483, 2.1237322e-06
    %v485 = vadd.f32 %v484, 0.00028619796
    %v486 = vmul.f32 %v483, %v485
    %v487 = vadd.f32 %v486, 0.0036580483
    %v488 = vmul.f32 %v483, %v487
    %v489 = vadd.f32 %v488, 0.05243302
    %v490 = vmul.f32 %v483, %v489
    %v491 = vadd.f32 %v490, 0.18741608
    %v492 = vmul.f32 %v483, %v491
    %v493 = vadd.f32 %v492, 1.1283791
    %v494 = vmul.f32 %v400, %v493
    %v495 = vmul.f32 %v483, 3.8918573e-05
    %v496 = vadd.f32 %v495, 0.001143296
    %v497 = vmul.f32 %v483, %v496
    %v498 = vadd.f32 %v497, 0.014752088
    %v499 = vmul.f32 %v483, %v498
    %v500 = vadd.f32 %v499, 0.112945676
    %v501 = vmul.f32 %v483, %v500
    %v502 = vadd.f32 %v501, 0.4994258
    %v503 = vmul.f32 %v483, %v502
    %v504 = vadd.f32 %v503, 1.0
    %v505 = vrcp.pop %v504
    %v506 = vmul.f32 %v504, %v505
    %v507 = vsub.f32 1.0, %v506
    %v508 = vmul.f32 %v505, %v507
    %v509 = vadd.f32 %v505, %v508
    %vm510 = vweird.f32 %v504
    %vm511 = vweird.f32 %v505
    %vm512 = vmor %vm510, %vm511
    %v513 = vsel %vm512, %v505, %v509
    %v514 = vand.u32 2147483647, %v504
    %vm515 = vcmp.eq.f32.partialorder %v514, 8.507059e+37
    %v516 = vand.u32 %v504, 2147483648
    %v517 = vor.u32 1.1754944e-38, %v516
    %v518 = vsel %vm515, %v517, %v513
    %v519 = vmul.f32 %v494, %v518
    %v520 = vmin.f32 %v519, 1.0
    %v521 = vmax.f32 %v520, -1.0
    %v522 = vmul.f32 %v401, %v401
    %v523 = vmin.f32 16.0, %v522
    %v524 = vmul.f32 %v523, 2.1237322e-06
    %v525 = vadd.f32 %v524, 0.00028619796
    %v526 = vmul.f32 %v523, %v525
    %v527 = vadd.f32 %v526, 0.0036580483
    %v528 = vmul.f32 %v523, %v527
    %v529 = vadd.f32 %v528, 0.05243302
    %v530 = vmul.f32 %v523, %v529
    %v531 = vadd.f32 %v530, 0.18741608
    %v532 = vmul.f32 %v523, %v531
    %v533 = vadd.f32 %v532, 1.1283791
    %v534 = vmul.f32 %v401, %v533
    %v535 = vmul.f32 %v523, 3.8918573e-05
    %v536 = vadd.f32 %v535, 0.001143296
    %v537 = vmul.f32 %v523, %v536
    %v538 = vadd.f32 %v537, 0.014752088
    %v539 = vmul.f32 %v523, %v538
    %v540 = vadd.f32 %v539, 0.112945676
    %v541 = vmul.f32 %v523, %v540
    %v542 = vadd.f32 %v541, 0.4994258
    %v543 = vmul.f32 %v523, %v542
    %v544 = vadd.f32 %v543, 1.0
    %v545 = vrcp.pop %v544
    %v546 = vmul.f32 %v544, %v545
    %v547 = vsub.f32 1.0, %v546
    %v548 = vmul.f32 %v545, %v547
    %v549 = vadd.f32 %v545, %v548
    %vm550 = vweird.f32 %v544
    %vm551 = vweird.f32 %v545
    %vm552 = vmor %vm550, %vm551
    %v553 = vsel %vm552, %v545, %v549
    %v554 = vand.u32 2147483647, %v544
    %vm555 = vcmp.eq.f32.partialorder %v554, 8.507059e+37
    %v556 = vand.u32 %v544, 2147483648
    %v557 = vor.u32 1.1754944e-38, %v556
    %v558 = vsel %vm555, %v557, %v553
    %v559 = vmul.f32 %v534, %v558
    %v560 = vmin.f32 %v559, 1.0
    %v561 = vmax.f32 %v560, -1.0
    %v562 = vadd.f32 %v441, 1.0
    %v563 = vadd.f32 %v481, 1.0
    %v564 = vadd.f32 %v521, 1.0
    %v565 = vadd.f32 %v561, 1.0
    %v566 = vmul.f32 %v394, %v562
    %v567 = vmul.f32 %v395, %v563
    %v568 = vmul.f32 %v396, %v564
    %v569 = vmul.f32 %v397, %v565
    %v570 = vld [vmem:[%s4] sm:$0xff]
    %v571 = vld [vmem:[%s4 + $0x8] sm:$0xff]
    %v572 = vld [vmem:[%s4 + $0x10] sm:$0xff]
    %v573 = vld [vmem:[%s4 + $0x18] sm:$0xff]
    %v574 = vld [vmem:[%s4 + $0x20] sm:$0xff]
    %v575 = vld [vmem:[%s4 + $0x28] sm:$0xff]
    %v576 = vld [vmem:[%s4 + $0x30] sm:$0xff]
    %v577 = vld [vmem:[%s4 + $0x38] sm:$0xff]
    %v578 = vld [vmem:[%s4 + $0x40] sm:$0xff]
    %v579 = vld [vmem:[%s4 + $0x48] sm:$0xff]
    %v580 = vld [vmem:[%s4 + $0x50] sm:$0xff]
    %v581 = vld [vmem:[%s4 + $0x58] sm:$0xff]
    %v582 = vld [vmem:[%s4 + $0x60] sm:$0xff]
    %v583 = vld [vmem:[%s4 + $0x68] sm:$0xff]
    %v584 = vld [vmem:[%s4 + $0x70] sm:$0xff]
    %v585 = vld [vmem:[%s4 + $0x78] sm:$0xff]
    %v586 = vperm.slane %v31, 3
    %587 = vmatpush.msra.mxu0 %v585
    %588 = vmatpush.msra.mxu0 %v584
    %589 = vmatpush.msra.mxu0 %v583
    %590 = vmatpush.msra.mxu0 %v582
    %591 = vmatpush.msra.mxu0 %v581
    %592 = vmatpush.msra.mxu0 %v580
    %593 = vmatpush.msra.mxu0 %v579
    %594 = vmatpush.msra.mxu0 %v578
    %595 = vmatpush.msra.mxu0 %v577
    %596 = vmatpush.msra.mxu0 %v576
    %597 = vmatpush.msra.mxu0 %v575
    %598 = vmatpush.msra.mxu0 %v574
    %599 = vmatpush.msra.mxu0 %v573
    %600 = vmatpush.msra.mxu0 %v572
    %601 = vmatpush.msra.mxu0 %v571
    %602 = vmatpush.msra.mxu0 %v570
    %603 = vmatmul.f32.gmra.mxu0 %v566
    %v604 = vpop.f32.mrf.mxu0
    %v605 = vadd.f32 %v586, %v604
    %606 = vmatmul.f32.gmra.mxu0 %v567
    %v607 = vpop.f32.mrf.mxu0
    %v608 = vadd.f32 %v586, %v607
    %609 = vmatmul.f32.gmra.mxu0 %v568
    %v610 = vpop.f32.mrf.mxu0
    %v611 = vadd.f32 %v586, %v610
    %612 = vmatmul.f32.gmra.mxu0 %v569
    %v613 = vpop.f32.mrf.mxu0
    %v614 = vadd.f32 %v586, %v613
    %615 = vdwg.mxu0
    %v616 = vadd.f32 %v344, %v605
    %v617 = vadd.f32 %v345, %v608
    %v618 = vadd.f32 %v346, %v611
    %v619 = vadd.f32 %v347, %v614
    %v620 = vsel %vm38, %v616, 0.0
    %621 = vadd.xlane.f32.xlu0 %v620
    %v622 = vpop.xlane.xlu0 %621
    %v623 = vsel %vm38, %v617, 0.0
    %624 = vadd.xlane.f32.xlu0 %v623
    %v625 = vpop.xlane.xlu0 %624
    %v626 = vsel %vm38, %v618, 0.0
    %627 = vadd.xlane.f32.xlu0 %v626
    %v628 = vpop.xlane.xlu0 %627
    %v629 = vsel %vm38, %v619, 0.0
    %630 = vadd.xlane.f32.xlu0 %v629
    %v631 = vpop.xlane.xlu0 %630
    %v632 = vmul.f32 %v622, %v261
    %v633 = vmul.f32 %v625, %v261
    %v634 = vmul.f32 %v628, %v261
    %v635 = vmul.f32 %v631, %v261
    %v636 = vsub.f32 %v616, %v632
    %v637 = vsub.f32 %v617, %v633
    %v638 = vsub.f32 %v618, %v634
    %v639 = vsub.f32 %v619, %v635
    %v640 = vmul.f32 %v636, %v636
    %v641 = vmul.f32 %v637, %v637
    %v642 = vmul.f32 %v638, %v638
    %v643 = vmul.f32 %v639, %v639
    %v644 = vsel %vm38, %v640, 0.0
    %645 = vadd.xlane.f32.xlu0 %v644
    %v646 = vpop.xlane.xlu0 %645
    %v647 = vsel %vm38, %v641, 0.0
    %648 = vadd.xlane.f32.xlu0 %v647
    %v649 = vpop.xlane.xlu0 %648
    %v650 = vsel %vm38, %v642, 0.0
    %651 = vadd.xlane.f32.xlu0 %v650
    %v652 = vpop.xlane.xlu0 %651
    %v653 = vsel %vm38, %v643, 0.0
    %654 = vadd.xlane.f32.xlu0 %v653
    %v655 = vpop.xlane.xlu0 %654
    %v656 = vmul.f32 %v646, %v261
    %v657 = vmul.f32 %v649, %v261
    %v658 = vmul.f32 %v652, %v261
    %v659 = vmul.f32 %v655, %v261
    %v660 = vadd.f32 %v656, 1e-05
    %v661 = vadd.f32 %v657, 1e-05
    %v662 = vadd.f32 %v658, 1e-05
    %v663 = vadd.f32 %v659, 1e-05
    %v664 = vrsqrt.pop %v660
    %v665 = vmul.f32 %v664, %v660
    %v666 = vmul.f32 %v665, %v664
    %v667 = vmul.f32 0.5, %v666
    %v668 = vsub.f32 1.5, %v667
    %v669 = vmul.f32 %v664, %v668
    %vm670 = vweird.f32 %v660
    %vm671 = vweird.f32 %v664
    %vm672 = vmor %vm670, %vm671
    %v673 = vsel %vm672, %v664, %v669
    %v674 = vrsqrt.pop %v661
    %v675 = vmul.f32 %v674, %v661
    %v676 = vmul.f32 %v675, %v674
    %v677 = vmul.f32 0.5, %v676
    %v678 = vsub.f32 1.5, %v677
    %v679 = vmul.f32 %v674, %v678
    %vm680 = vweird.f32 %v661
    %vm681 = vweird.f32 %v674
    %vm682 = vmor %vm680, %vm681
    %v683 = vsel %vm682, %v674, %v679
    %v684 = vrsqrt.pop %v662
    %v685 = vmul.f32 %v684, %v662
    %v686 = vmul.f32 %v685, %v684
    %v687 = vmul.f32 0.5, %v686
    %v688 = vsub.f32 1.5, %v687
    %v689 = vmul.f32 %v684, %v688
    %vm690 = vweird.f32 %v662
    %vm691 = vweird.f32 %v684
    %vm692 = vmor %vm690, %vm691
    %v693 = vsel %vm692, %v684, %v689
    %v694 = vrsqrt.pop %v663
    %v695 = vmul.f32 %v694, %v663
    %v696 = vmul.f32 %v695, %v694
    %v697 = vmul.f32 0.5, %v696
    %v698 = vsub.f32 1.5, %v697
    %v699 = vmul.f32 %v694, %v698
    %vm700 = vweird.f32 %v663
    %vm701 = vweird.f32 %v694
    %vm702 = vmor %vm700, %vm701
    %v703 = vsel %vm702, %v694, %v699
    %v704 = vmul.f32 %v636, %v673
    %v705 = vmul.f32 %v637, %v683
    %v706 = vmul.f32 %v638, %v693
    %v707 = vmul.f32 %v639, %v703
    %v708 = vperm.slane %v31, 4
    %v709 = vmul.f32 %v704, %v708
    %v710 = vmul.f32 %v705, %v708
    %v711 = vmul.f32 %v706, %v708
    %v712 = vmul.f32 %v707, %v708
    %v713 = vperm.slane %v31, 5
    %v714 = vadd.f32 %v709, %v713
    %v715 = vadd.f32 %v710, %v713
    %v716 = vadd.f32 %v711, %v713
    %v717 = vadd.f32 %v712, %v713
    %718 = vst.msk [vmem:[#allocation2] sm:$0xff] %vm38, %v714
    %719 = vst.msk [vmem:[#allocation2 + $0x8] sm:$0xff] %vm38, %v715
    %720 = vst.msk [vmem:[#allocation2 + $0x10] sm:$0xff] %vm38, %v716
    %721 = vst.msk [vmem:[#allocation2 + $0x18] sm:$0xff] %vm38, %v717
    // Predicated region
    $region30: #{tpu_custom_call.1} parent=1 // pred_check
      _
    $region31: #{tpu_custom_call.1} parent=1 // pred_check_branch
      %723 = sbr.rel (0) target = $region33
    $region32: #{tpu_custom_call.1} parent=1 // pred_region
      %725 = vsyncadd [#allocation3], 0
      %s726 = sshll.u32 [#allocation2], 4
      %s727 = int_to_ptr.vmem [resolvable:$true] %s726
      %s728 = sshll.u32 %s7, 4
      %s729 = int_to_ptr.hbm [resolvable:$true] %s728
      %734 = dma.vmem_to_hbm [thread:$0]  %s727, 512, %s729, [#allocation3], 128, 128, 8
    $region33: #{tpu_custom_call.1} parent=1 // pred_fallthru
      _
    // Predicated region
    $region34: #{tpu_custom_call.1} parent=1 // pred_check
      _
    $region35: #{tpu_custom_call.1} parent=1 // pred_check_branch
      %736 = sbr.rel (0) target = $region37
    $region36: #{tpu_custom_call.1} parent=1 // pred_region
      %738 = dma.done [#allocation3], 512
    $region37: #{tpu_custom_call.1} parent=1 // pred_fallthru
      _
    %739 = vsyncpa [#allocation3], 1

</llo_original>
